<compile_context>
chip_gen: v5e
topology: v5e:2x2
jax: 0.10.0
libtpu: 0.0.40
codegen_flags: <defaults>
</compile_context>

<pallas_src>
import functools

import jax
import jax.numpy as jnp
from jax.experimental import pallas as pl
from jax.experimental.pallas import tpu as pltpu


def _round_up(x, m):
    return ((x + m - 1) // m) * m


def _cdiv(a, b):
    return (a + b - 1) // b


# --------------------------------------------------------------------------- kernel

def _fused_disc_kernel(zr_ref, zi_ref, *refs, layer_dims, latent_dim, compute_dtype):
    """Fused 6-layer complex MLP.

    refs = (w0, b0, ab0, ..., w4, b4, ab4, w5, b5, out_ref, act_scratch)
    act_scratch: (TILE_B, 2*Fp_max) persistent VMEM in compute dtype; each layer's
    output is written as [real | imag] at static 128-aligned offsets.
    """
    *param_refs, out_ref, act_ref = refs
    num_layers = len(layer_dims)
    tb = zr_ref.shape[0]

    # ---- assemble the first [real | imag] window in the activation scratch -----
    # Zero the window first: uninitialized VMEM may hold NaN bit-patterns which
    # would poison the MXU accumulation even against zero weight rows.
    lp = layer_dims[0][0]
    act_ref[:, 0:2 * lp] = jnp.zeros((tb, 2 * lp), compute_dtype)
    act_ref[:, 0:latent_dim] = zr_ref[...].astype(compute_dtype)
    act_ref[:, lp:lp + latent_dim] = zi_ref[...].astype(compute_dtype)

    idx = 0
    for layer, (kp, fp) in enumerate(layer_dims):
        is_last = layer == num_layers - 1
        w = param_refs[idx][...]; idx += 1           # (2*kp, 2*fp) compute dtype
        b = param_refs[idx][...]; idx += 1           # (1, 2*fp)    f32
        ab = None
        if not is_last:
            ab = param_refs[idx][...]; idx += 1      # (1, fp)      f32

        act = act_ref[:, 0:2 * kp]                   # [real | imag], compute dtype
        # One stacked MXU matmul == complex matmul, f32 accumulation.
        y = jnp.dot(act, w, preferred_element_type=jnp.float32) + b
        yr = y[:, :fp]
        yi = y[:, fp:]

        sq = yr * yr + yi * yi                       # f32 activation math
        inv_mag = jax.lax.rsqrt(sq + 1e-12)          # EUP rsqrt, no sqrt/divide
        if is_last:
            # modSigmoid(z) = sigmoid(|z|) * z/|z|
            scale = jax.nn.sigmoid(sq * inv_mag) * inv_mag
            out_ref[:, 0:fp] = yr * scale
            out_ref[:, fp:2 * fp] = yi * scale
        else:
            # modReLU(z) = relu(|z|+b) * z/|z|, folded: |z|*inv_mag ~= 1
            scale = jnp.where(sq * inv_mag + ab > 0.0, 1.0 + ab * inv_mag, 0.0)
            act_ref[:, 0:fp] = (yr * scale).astype(compute_dtype)
            act_ref[:, fp:2 * fp] = (yi * scale).astype(compute_dtype)


# --------------------------------------------------------------------------- params

def init_params(key, latent_dim, hidden_units):
    """Deterministic parameter init (shapes match the torch module __init__).

    Weights are stored pre-transposed as (f_in, f_out): y = x @ W + b.
    """
    dims = [latent_dim] + [hidden_units] * 5 + [2]
    params = []
    for layer in range(6):
        f_in, f_out = dims[layer], dims[layer + 1]
        k = jax.random.fold_in(key, layer)
        k1, k2, k3, k4, k5 = jax.random.split(k, 5)
        bound = 1.0 / jnp.sqrt(jnp.float32(f_in))
        wr = jax.random.uniform(k1, (f_in, f_out), jnp.float32, -bound, bound)
        wi = jax.random.uniform(k2, (f_in, f_out), jnp.float32, -bound, bound)
        br = jax.random.uniform(k3, (1, f_out), jnp.float32, -bound, bound)
        bi = jax.random.uniform(k4, (1, f_out), jnp.float32, -bound, bound)
        ab = jax.random.uniform(k5, (1, f_out), jnp.float32, -0.1, 0.1)  # modReLU bias
        params.append((wr, wi, br, bi, ab))
    return params


def pack_params(params, compute_dtype=jnp.bfloat16):
    """Pad feature dims to 128 multiples and stack real/imag into one matmul/layer.

    Padded rows/cols and padded biases are ZERO so padding never leaks forward.
    Weights are stored in compute_dtype; biases / modReLU biases stay f32.
    """
    num_layers = len(params)
    packed = []
    for layer, (wr, wi, br, bi, ab) in enumerate(params):
        f_in, f_out = wr.shape
        kp = _round_up(f_in, 128)
        fp = _round_up(f_out, 128)

        w_full = jnp.zeros((2 * kp, 2 * fp), jnp.float32)
        w_full = w_full.at[:f_in, :f_out].set(wr)                 # xr -> yr
        w_full = w_full.at[kp:kp + f_in, :f_out].set(-wi)         # xi -> yr
        w_full = w_full.at[:f_in, fp:fp + f_out].set(wi)          # xr -> yi
        w_full = w_full.at[kp:kp + f_in, fp:fp + f_out].set(wr)   # xi -> yi

        b_full = jnp.zeros((1, 2 * fp), jnp.float32)
        b_full = b_full.at[:, :f_out].set(br)
        b_full = b_full.at[:, fp:fp + f_out].set(bi)

        entry = [w_full.astype(compute_dtype), b_full]
        if layer != num_layers - 1:
            ab_full = jnp.zeros((1, fp), jnp.float32).at[:, :f_out].set(ab)
            entry.append(ab_full)
        packed.append(tuple(entry))
    return packed


# --------------------------------------------------------------------------- wrapper

def _resident_spec(shape):
    """BlockSpec for a weight/bias that stays resident in VMEM across the grid."""
    index_map = lambda i: (0, 0)
    try:
        # Constant index_map => one buffer is enough; avoids the default
        # double-buffer (2x VMEM + a redundant weight DMA).
        return pl.BlockSpec(shape, index_map, pipeline_mode=pl.Buffered(1))
    except (TypeError, AttributeError):
        return pl.BlockSpec(shape, index_map)


def _vmem_cap_bytes():
    try:
        cap = int(pltpu.get_tpu_info().vmem_capacity_bytes)
    except Exception:
        cap = 64 << 20                  # unknown chip -> assume v7x-sized VMEM
    # Leave headroom for compiler-internal scratch (≈56 MiB on v7x, ≈108 MiB v5e/v6e).
    return max(min(int(cap * 0.85), cap - (8 << 20)), 16 << 20)


def discriminator_forward(zr, zi, params, *, compute_dtype=jnp.bfloat16, max_tile_b=256):
    """Full forward pass of CVFactorVAEDiscriminator via one fused Pallas kernel."""
    latent_dim = params[0][0].shape[0]
    out_dim = params[-1][0].shape[1]

    layer_dims = tuple((_round_up(wr.shape[0], 128), _round_up(wr.shape[1], 128))
                       for (wr, *_rest) in params)
    op = layer_dims[-1][1]
    fp_max = max(max(kp, fp) for kp, fp in layer_dims)

    packed = pack_params(params, compute_dtype)
    flat_params = [a for entry in packed for a in entry]

    batch = zr.shape[0]
    # Adaptive batch tiling: smallest 8-aligned tile covering the batch in
    # ceil(batch/max_tile_b) grid steps -> minimal dead padded rows.
    b8 = _round_up(max(batch, 8), 8)
    n_tiles = _cdiv(b8, max_tile_b)
    tile_b = _round_up(_cdiv(b8, n_tiles), 8)
    b_pad = n_tiles * tile_b

    zr_p = jnp.pad(zr.astype(jnp.float32), ((0, b_pad - batch), (0, 0)))
    zi_p = jnp.pad(zi.astype(jnp.float32), ((0, b_pad - batch), (0, 0)))

    in_specs = [pl.BlockSpec((tile_b, latent_dim), lambda i: (i, 0)),
                pl.BlockSpec((tile_b, latent_dim), lambda i: (i, 0))]
    in_specs += [_resident_spec(a.shape) for a in flat_params]
    out_specs = pl.BlockSpec((tile_b, 2 * op), lambda i: (i, 0))

    # VMEM budget: single-buffered resident params + double-buffered in/out tiles
    # + activation scratch + f32 layer temporaries, capped per-generation.
    cdt_bytes = jnp.dtype(compute_dtype).itemsize
    param_bytes = sum(a.size * a.dtype.itemsize for a in flat_params)
    io_bytes = 2 * (2 * tile_b * latent_dim * 4) + 2 * (tile_b * 2 * op * 4)
    scratch_bytes = tile_b * 2 * fp_max * cdt_bytes
    temp_bytes = 4 * tile_b * 2 * fp_max * 4
    needed = param_bytes + io_bytes + scratch_bytes + temp_bytes + (2 << 20)
    vmem_limit = int(max(min(needed, _vmem_cap_bytes()), 16 << 20))

    kernel = functools.partial(_fused_disc_kernel,
                               layer_dims=layer_dims,
                               latent_dim=latent_dim,
                               compute_dtype=compute_dtype)

    y = pl.pallas_call(
        kernel,
        out_shape=jax.ShapeDtypeStruct((b_pad, 2 * op), jnp.float32),
        grid=(n_tiles,),
        in_specs=in_specs,
        out_specs=out_specs,
        scratch_shapes=[pltpu.VMEM((tile_b, 2 * fp_max), compute_dtype)],
        compiler_params=pltpu.CompilerParams(
            # Weight-DMA-bound at realistic batch sizes: keep the whole batch on one
            # TensorCore so resident weights are fetched once (batch-parallel across
            # v7x's two TCs would duplicate the weight DMA and VMEM footprint).
            dimension_semantics=("arbitrary",),
            vmem_limit_bytes=vmem_limit,
        ),
    )(zr_p, zi_p, *flat_params)

    out_r = y[:batch, :out_dim]
    out_i = y[:batch, op:op + out_dim]
    return out_r, out_i


def discriminator_forward_ref(zr, zi, params):
    """Pure-JAX reference (same activation definition, unstacked / unpadded weights)."""
    xr, xi = zr, zi
    n_layers = len(params)
    for layer, (wr, wi, br, bi, ab) in enumerate(params):
        yr = xr @ wr - xi @ wi + br
        yi_ = xr @ wi + xi @ wr + bi
        sq = yr * yr + yi_ * yi_
        inv_mag = jax.lax.rsqrt(sq + 1e-12)
        mag = sq * inv_mag
        if layer == n_layers - 1:
            scale = jax.nn.sigmoid(mag) * inv_mag
        else:
            scale = jnp.maximum(mag + ab, 0.0) * inv_mag
        xr, xi = yr * scale, yi_ * scale
    return xr, xi


if __name__ == "__main__":
    LATENT_DIM = 16
    HIDDEN_UNITS = 32   # small stand-in for the production 1000-unit hidden width
    BATCH = 10          # deliberately not 8/128-aligned -> exercises padding logic

    key = jax.random.PRNGKey(0)
    k_params, k_zr, k_zi = jax.random.split(key, 3)

    params = init_params(k_params, LATENT_DIM, HIDDEN_UNITS)
    zr = jax.random.normal(k_zr, (BATCH, LATENT_DIM), jnp.float32)
    zi = jax.random.normal(k_zi, (BATCH, LATENT_DIM), jnp.float32)

    ref_r, ref_i = discriminator_forward_ref(zr, zi, params)

    # f32 compute path (exact-ish), single grid step.
    out_r, out_i = discriminator_forward(zr, zi, params, compute_dtype=jnp.float32)
    jax.block_until_ready((out_r, out_i))
    assert out_r.shape == (BATCH, 2) and out_i.shape == (BATCH, 2)
    assert jnp.allclose(out_r, ref_r, atol=2e-3, rtol=2e-3)
    assert jnp.allclose(out_i, ref_i, atol=2e-3, rtol=2e-3)

    # Production setting: bf16 weights/activations, f32 accumulation.  Small
    # max_tile_b forces a multi-step grid to exercise resident single-buffered
    # weights across grid iterations.
    bf_r, bf_i = discriminator_forward(zr, zi, params,
                                       compute_dtype=jnp.bfloat16, max_tile_b=8)
    jax.block_until_ready((bf_r, bf_i))
    assert jnp.allclose(bf_r, ref_r, atol=1e-1)
    assert jnp.allclose(bf_i, ref_i, atol=1e-1)

    print("KERNEL_OK")
</pallas_src>

<mosaic_0001>
module attributes {stable_mosaic.version = 11 : i64} {
  func.func @_fused_disc_kernel(%arg0: i32, %arg1: memref<16x16xf32, #tpu.memory_space<vmem>>, %arg2: memref<16x16xf32, #tpu.memory_space<vmem>>, %arg3: memref<256x256xf32, #tpu.memory_space<vmem>>, %arg4: memref<1x256xf32, #tpu.memory_space<vmem>>, %arg5: memref<1x128xf32, #tpu.memory_space<vmem>>, %arg6: memref<256x256xf32, #tpu.memory_space<vmem>>, %arg7: memref<1x256xf32, #tpu.memory_space<vmem>>, %arg8: memref<1x128xf32, #tpu.memory_space<vmem>>, %arg9: memref<256x256xf32, #tpu.memory_space<vmem>>, %arg10: memref<1x256xf32, #tpu.memory_space<vmem>>, %arg11: memref<1x128xf32, #tpu.memory_space<vmem>>, %arg12: memref<256x256xf32, #tpu.memory_space<vmem>>, %arg13: memref<1x256xf32, #tpu.memory_space<vmem>>, %arg14: memref<1x128xf32, #tpu.memory_space<vmem>>, %arg15: memref<256x256xf32, #tpu.memory_space<vmem>>, %arg16: memref<1x256xf32, #tpu.memory_space<vmem>>, %arg17: memref<1x128xf32, #tpu.memory_space<vmem>>, %arg18: memref<256x256xf32, #tpu.memory_space<vmem>>, %arg19: memref<1x256xf32, #tpu.memory_space<vmem>>, %arg20: memref<16x256xf32, #tpu.memory_space<vmem>>, %arg21: memref<16x256xf32, #tpu.memory_space<vmem>>) attributes {dimension_semantics = [#tpu.dimension_semantics<arbitrary>], iteration_bounds = array<i64: 1>, scalar_prefetch = 0 : i64, scratch_operands = 1 : i64, tpu.core_type = #tpu.core_type<tc>, window_params = [{transform_indices = @transform_0, window_bounds = array<i64: 16, 16>}, {transform_indices = @transform_1, window_bounds = array<i64: 16, 16>}, {pipeline_mode = #tpu.pipeline_mode<synchronous>, transform_indices = @transform_2, window_bounds = array<i64: 256, 256>}, {pipeline_mode = #tpu.pipeline_mode<synchronous>, transform_indices = @transform_3, window_bounds = array<i64: 1, 256>}, {pipeline_mode = #tpu.pipeline_mode<synchronous>, transform_indices = @transform_4, window_bounds = array<i64: 1, 128>}, {pipeline_mode = #tpu.pipeline_mode<synchronous>, transform_indices = @transform_5, window_bounds = array<i64: 256, 256>}, {pipeline_mode = #tpu.pipeline_mode<synchronous>, transform_indices = @transform_6, window_bounds = array<i64: 1, 256>}, {pipeline_mode = #tpu.pipeline_mode<synchronous>, transform_indices = @transform_7, window_bounds = array<i64: 1, 128>}, {pipeline_mode = #tpu.pipeline_mode<synchronous>, transform_indices = @transform_8, window_bounds = array<i64: 256, 256>}, {pipeline_mode = #tpu.pipeline_mode<synchronous>, transform_indices = @transform_9, window_bounds = array<i64: 1, 256>}, {pipeline_mode = #tpu.pipeline_mode<synchronous>, transform_indices = @transform_10, window_bounds = array<i64: 1, 128>}, {pipeline_mode = #tpu.pipeline_mode<synchronous>, transform_indices = @transform_11, window_bounds = array<i64: 256, 256>}, {pipeline_mode = #tpu.pipeline_mode<synchronous>, transform_indices = @transform_12, window_bounds = array<i64: 1, 256>}, {pipeline_mode = #tpu.pipeline_mode<synchronous>, transform_indices = @transform_13, window_bounds = array<i64: 1, 128>}, {pipeline_mode = #tpu.pipeline_mode<synchronous>, transform_indices = @transform_14, window_bounds = array<i64: 256, 256>}, {pipeline_mode = #tpu.pipeline_mode<synchronous>, transform_indices = @transform_15, window_bounds = array<i64: 1, 256>}, {pipeline_mode = #tpu.pipeline_mode<synchronous>, transform_indices = @transform_16, window_bounds = array<i64: 1, 128>}, {pipeline_mode = #tpu.pipeline_mode<synchronous>, transform_indices = @transform_17, window_bounds = array<i64: 256, 256>}, {pipeline_mode = #tpu.pipeline_mode<synchronous>, transform_indices = @transform_18, window_bounds = array<i64: 1, 256>}, {transform_indices = @transform_19, window_bounds = array<i64: 16, 256>}]} {
    %cst = arith.constant 0.000000e+00 : f32
    %0 = vector.broadcast %cst : f32 to vector<16x256xf32>
    %c0 = arith.constant 0 : index
    %c0_0 = arith.constant 0 : index
    %1 = vector.load %arg21[%c0, %c0_0] : memref<16x256xf32, #tpu.memory_space<vmem>>, vector<16x256xf32>
    tpu.vector_store %arg21[%c0, %c0_0], %0 {strides = array<i32>} : memref<16x256xf32, #tpu.memory_space<vmem>>, vector<16x256xf32>,
    %c0_1 = arith.constant 0 : index
    %c0_2 = arith.constant 0 : index
    %2 = vector.load %arg1[%c0_1, %c0_2] : memref<16x16xf32, #tpu.memory_space<vmem>>, vector<16x16xf32>
    %c0_3 = arith.constant 0 : index
    %c0_4 = arith.constant 0 : index
    %3 = vector.load %arg21[%c0_3, %c0_4] : memref<16x256xf32, #tpu.memory_space<vmem>>, vector<16x16xf32>
    tpu.vector_store %arg21[%c0_3, %c0_4], %2 {strides = array<i32>} : memref<16x256xf32, #tpu.memory_space<vmem>>, vector<16x16xf32>,
    %c0_5 = arith.constant 0 : index
    %c0_6 = arith.constant 0 : index
    %4 = vector.load %arg2[%c0_5, %c0_6] : memref<16x16xf32, #tpu.memory_space<vmem>>, vector<16x16xf32>
    %c0_7 = arith.constant 0 : index
    %c128 = arith.constant 128 : index
    %5 = vector.load %arg21[%c0_7, %c128] : memref<16x256xf32, #tpu.memory_space<vmem>>, vector<16x16xf32>
    tpu.vector_store %arg21[%c0_7, %c128], %4 {strides = array<i32>} : memref<16x256xf32, #tpu.memory_space<vmem>>, vector<16x16xf32>,
    %c0_8 = arith.constant 0 : index
    %c0_9 = arith.constant 0 : index
    %6 = vector.load %arg3[%c0_8, %c0_9] : memref<256x256xf32, #tpu.memory_space<vmem>>, vector<256x256xf32>
    %c0_10 = arith.constant 0 : index
    %c0_11 = arith.constant 0 : index
    %7 = vector.load %arg4[%c0_10, %c0_11] : memref<1x256xf32, #tpu.memory_space<vmem>>, vector<1x256xf32>
    %c0_12 = arith.constant 0 : index
    %c0_13 = arith.constant 0 : index
    %8 = vector.load %arg5[%c0_12, %c0_13] : memref<1x128xf32, #tpu.memory_space<vmem>>, vector<1x128xf32>
    %c0_14 = arith.constant 0 : index
    %c0_15 = arith.constant 0 : index
    %9 = vector.load %arg21[%c0_14, %c0_15] : memref<16x256xf32, #tpu.memory_space<vmem>>, vector<16x256xf32>
    %cst_16 = arith.constant dense<0.000000e+00> : vector<16x256xf32>
    %10 = tpu.matmul %9, %6, %cst_16 {dimension_numbers = #tpu.dot_dimension_numbers<[1], [0], [0], [1], [0, 0, 1, 1], [], []>} : vector<16x256xf32>, vector<256x256xf32>, vector<16x256xf32> -> vector<16x256xf32>
    %11 = vector.broadcast %7 : vector<1x256xf32> to vector<16x256xf32>
    %12 = arith.addf %10, %11 : vector<16x256xf32>
    %13 = vector.extract_strided_slice %12 {offsets = [0, 0], sizes = [16, 128], strides = [1, 1]} : vector<16x256xf32> to vector<16x128xf32>
    %14 = vector.extract_strided_slice %12 {offsets = [0, 128], sizes = [16, 128], strides = [1, 1]} : vector<16x256xf32> to vector<16x128xf32>
    %15 = arith.mulf %13, %13 : vector<16x128xf32>
    %16 = arith.mulf %14, %14 : vector<16x128xf32>
    %17 = arith.addf %15, %16 : vector<16x128xf32>
    %cst_17 = arith.constant 9.99999996E-13 : f32
    %18 = vector.broadcast %cst_17 : f32 to vector<16x128xf32>
    %19 = arith.addf %17, %18 : vector<16x128xf32>
    %20 = math.rsqrt %19 : vector<16x128xf32>
    %21 = arith.mulf %17, %20 : vector<16x128xf32>
    %22 = vector.broadcast %8 : vector<1x128xf32> to vector<16x128xf32>
    %23 = arith.addf %21, %22 : vector<16x128xf32>
    %cst_18 = arith.constant 0.000000e+00 : f32
    %24 = vector.broadcast %cst_18 : f32 to vector<16x128xf32>
    %25 = arith.cmpf ogt, %23, %24 : vector<16x128xf32>
    %26 = vector.broadcast %8 : vector<1x128xf32> to vector<16x128xf32>
    %27 = arith.mulf %26, %20 : vector<16x128xf32>
    %cst_19 = arith.constant 1.000000e+00 : f32
    %28 = vector.broadcast %cst_19 : f32 to vector<16x128xf32>
    %29 = arith.addf %28, %27 : vector<16x128xf32>
    %cst_20 = arith.constant 0.000000e+00 : f32
    %30 = vector.broadcast %cst_20 : f32 to vector<16x128xf32>
    %31 = arith.select %25, %29, %30 : vector<16x128xi1>, vector<16x128xf32>
    %32 = arith.mulf %13, %31 : vector<16x128xf32>
    %c0_21 = arith.constant 0 : index
    %c0_22 = arith.constant 0 : index
    %33 = vector.load %arg21[%c0_21, %c0_22] : memref<16x256xf32, #tpu.memory_space<vmem>>, vector<16x128xf32>
    tpu.vector_store %arg21[%c0_21, %c0_22], %32 {strides = array<i32>} : memref<16x256xf32, #tpu.memory_space<vmem>>, vector<16x128xf32>,
    %34 = arith.mulf %14, %31 : vector<16x128xf32>
    %c0_23 = arith.constant 0 : index
    %c128_24 = arith.constant 128 : index
    %35 = vector.load %arg21[%c0_23, %c128_24] : memref<16x256xf32, #tpu.memory_space<vmem>>, vector<16x128xf32>
    tpu.vector_store %arg21[%c0_23, %c128_24], %34 {strides = array<i32>} : memref<16x256xf32, #tpu.memory_space<vmem>>, vector<16x128xf32>,
    %c0_25 = arith.constant 0 : index
    %c0_26 = arith.constant 0 : index
    %36 = vector.load %arg6[%c0_25, %c0_26] : memref<256x256xf32, #tpu.memory_space<vmem>>, vector<256x256xf32>
    %c0_27 = arith.constant 0 : index
    %c0_28 = arith.constant 0 : index
    %37 = vector.load %arg7[%c0_27, %c0_28] : memref<1x256xf32, #tpu.memory_space<vmem>>, vector<1x256xf32>
    %c0_29 = arith.constant 0 : index
    %c0_30 = arith.constant 0 : index
    %38 = vector.load %arg8[%c0_29, %c0_30] : memref<1x128xf32, #tpu.memory_space<vmem>>, vector<1x128xf32>
    %c0_31 = arith.constant 0 : index
    %c0_32 = arith.constant 0 : index
    %39 = vector.load %arg21[%c0_31, %c0_32] : memref<16x256xf32, #tpu.memory_space<vmem>>, vector<16x256xf32>
    %cst_33 = arith.constant dense<0.000000e+00> : vector<16x256xf32>
    %40 = tpu.matmul %39, %36, %cst_33 {dimension_numbers = #tpu.dot_dimension_numbers<[1], [0], [0], [1], [0, 0, 1, 1], [], []>} : vector<16x256xf32>, vector<256x256xf32>, vector<16x256xf32> -> vector<16x256xf32>
    %41 = vector.broadcast %37 : vector<1x256xf32> to vector<16x256xf32>
    %42 = arith.addf %40, %41 : vector<16x256xf32>
    %43 = vector.extract_strided_slice %42 {offsets = [0, 0], sizes = [16, 128], strides = [1, 1]} : vector<16x256xf32> to vector<16x128xf32>
    %44 = vector.extract_strided_slice %42 {offsets = [0, 128], sizes = [16, 128], strides = [1, 1]} : vector<16x256xf32> to vector<16x128xf32>
    %45 = arith.mulf %43, %43 : vector<16x128xf32>
    %46 = arith.mulf %44, %44 : vector<16x128xf32>
    %47 = arith.addf %45, %46 : vector<16x128xf32>
    %cst_34 = arith.constant 9.99999996E-13 : f32
    %48 = vector.broadcast %cst_34 : f32 to vector<16x128xf32>
    %49 = arith.addf %47, %48 : vector<16x128xf32>
    %50 = math.rsqrt %49 : vector<16x128xf32>
    %51 = arith.mulf %47, %50 : vector<16x128xf32>
    %52 = vector.broadcast %38 : vector<1x128xf32> to vector<16x128xf32>
    %53 = arith.addf %51, %52 : vector<16x128xf32>
    %cst_35 = arith.constant 0.000000e+00 : f32
    %54 = vector.broadcast %cst_35 : f32 to vector<16x128xf32>
    %55 = arith.cmpf ogt, %53, %54 : vector<16x128xf32>
    %56 = vector.broadcast %38 : vector<1x128xf32> to vector<16x128xf32>
    %57 = arith.mulf %56, %50 : vector<16x128xf32>
    %cst_36 = arith.constant 1.000000e+00 : f32
    %58 = vector.broadcast %cst_36 : f32 to vector<16x128xf32>
    %59 = arith.addf %58, %57 : vector<16x128xf32>
    %cst_37 = arith.constant 0.000000e+00 : f32
    %60 = vector.broadcast %cst_37 : f32 to vector<16x128xf32>
    %61 = arith.select %55, %59, %60 : vector<16x128xi1>, vector<16x128xf32>
    %62 = arith.mulf %43, %61 : vector<16x128xf32>
    %c0_38 = arith.constant 0 : index
    %c0_39 = arith.constant 0 : index
    %63 = vector.load %arg21[%c0_38, %c0_39] : memref<16x256xf32, #tpu.memory_space<vmem>>, vector<16x128xf32>
    tpu.vector_store %arg21[%c0_38, %c0_39], %62 {strides = array<i32>} : memref<16x256xf32, #tpu.memory_space<vmem>>, vector<16x128xf32>,
    %64 = arith.mulf %44, %61 : vector<16x128xf32>
    %c0_40 = arith.constant 0 : index
    %c128_41 = arith.constant 128 : index
    %65 = vector.load %arg21[%c0_40, %c128_41] : memref<16x256xf32, #tpu.memory_space<vmem>>, vector<16x128xf32>
    tpu.vector_store %arg21[%c0_40, %c128_41], %64 {strides = array<i32>} : memref<16x256xf32, #tpu.memory_space<vmem>>, vector<16x128xf32>,
    %c0_42 = arith.constant 0 : index
    %c0_43 = arith.constant 0 : index
    %66 = vector.load %arg9[%c0_42, %c0_43] : memref<256x256xf32, #tpu.memory_space<vmem>>, vector<256x256xf32>
    %c0_44 = arith.constant 0 : index
    %c0_45 = arith.constant 0 : index
    %67 = vector.load %arg10[%c0_44, %c0_45] : memref<1x256xf32, #tpu.memory_space<vmem>>, vector<1x256xf32>
    %c0_46 = arith.constant 0 : index
    %c0_47 = arith.constant 0 : index
    %68 = vector.load %arg11[%c0_46, %c0_47] : memref<1x128xf32, #tpu.memory_space<vmem>>, vector<1x128xf32>
    %c0_48 = arith.constant 0 : index
    %c0_49 = arith.constant 0 : index
    %69 = vector.load %arg21[%c0_48, %c0_49] : memref<16x256xf32, #tpu.memory_space<vmem>>, vector<16x256xf32>
    %cst_50 = arith.constant dense<0.000000e+00> : vector<16x256xf32>
    %70 = tpu.matmul %69, %66, %cst_50 {dimension_numbers = #tpu.dot_dimension_numbers<[1], [0], [0], [1], [0, 0, 1, 1], [], []>} : vector<16x256xf32>, vector<256x256xf32>, vector<16x256xf32> -> vector<16x256xf32>
    %71 = vector.broadcast %67 : vector<1x256xf32> to vector<16x256xf32>
    %72 = arith.addf %70, %71 : vector<16x256xf32>
    %73 = vector.extract_strided_slice %72 {offsets = [0, 0], sizes = [16, 128], strides = [1, 1]} : vector<16x256xf32> to vector<16x128xf32>
    %74 = vector.extract_strided_slice %72 {offsets = [0, 128], sizes = [16, 128], strides = [1, 1]} : vector<16x256xf32> to vector<16x128xf32>
    %75 = arith.mulf %73, %73 : vector<16x128xf32>
    %76 = arith.mulf %74, %74 : vector<16x128xf32>
    %77 = arith.addf %75, %76 : vector<16x128xf32>
    %cst_51 = arith.constant 9.99999996E-13 : f32
    %78 = vector.broadcast %cst_51 : f32 to vector<16x128xf32>
    %79 = arith.addf %77, %78 : vector<16x128xf32>
    %80 = math.rsqrt %79 : vector<16x128xf32>
    %81 = arith.mulf %77, %80 : vector<16x128xf32>
    %82 = vector.broadcast %68 : vector<1x128xf32> to vector<16x128xf32>
    %83 = arith.addf %81, %82 : vector<16x128xf32>
    %cst_52 = arith.constant 0.000000e+00 : f32
    %84 = vector.broadcast %cst_52 : f32 to vector<16x128xf32>
    %85 = arith.cmpf ogt, %83, %84 : vector<16x128xf32>
    %86 = vector.broadcast %68 : vector<1x128xf32> to vector<16x128xf32>
    %87 = arith.mulf %86, %80 : vector<16x128xf32>
    %cst_53 = arith.constant 1.000000e+00 : f32
    %88 = vector.broadcast %cst_53 : f32 to vector<16x128xf32>
    %89 = arith.addf %88, %87 : vector<16x128xf32>
    %cst_54 = arith.constant 0.000000e+00 : f32
    %90 = vector.broadcast %cst_54 : f32 to vector<16x128xf32>
    %91 = arith.select %85, %89, %90 : vector<16x128xi1>, vector<16x128xf32>
    %92 = arith.mulf %73, %91 : vector<16x128xf32>
    %c0_55 = arith.constant 0 : index
    %c0_56 = arith.constant 0 : index
    %93 = vector.load %arg21[%c0_55, %c0_56] : memref<16x256xf32, #tpu.memory_space<vmem>>, vector<16x128xf32>
    tpu.vector_store %arg21[%c0_55, %c0_56], %92 {strides = array<i32>} : memref<16x256xf32, #tpu.memory_space<vmem>>, vector<16x128xf32>,
    %94 = arith.mulf %74, %91 : vector<16x128xf32>
    %c0_57 = arith.constant 0 : index
    %c128_58 = arith.constant 128 : index
    %95 = vector.load %arg21[%c0_57, %c128_58] : memref<16x256xf32, #tpu.memory_space<vmem>>, vector<16x128xf32>
    tpu.vector_store %arg21[%c0_57, %c128_58], %94 {strides = array<i32>} : memref<16x256xf32, #tpu.memory_space<vmem>>, vector<16x128xf32>,
    %c0_59 = arith.constant 0 : index
    %c0_60 = arith.constant 0 : index
    %96 = vector.load %arg12[%c0_59, %c0_60] : memref<256x256xf32, #tpu.memory_space<vmem>>, vector<256x256xf32>
    %c0_61 = arith.constant 0 : index
    %c0_62 = arith.constant 0 : index
    %97 = vector.load %arg13[%c0_61, %c0_62] : memref<1x256xf32, #tpu.memory_space<vmem>>, vector<1x256xf32>
    %c0_63 = arith.constant 0 : index
    %c0_64 = arith.constant 0 : index
    %98 = vector.load %arg14[%c0_63, %c0_64] : memref<1x128xf32, #tpu.memory_space<vmem>>, vector<1x128xf32>
    %c0_65 = arith.constant 0 : index
    %c0_66 = arith.constant 0 : index
    %99 = vector.load %arg21[%c0_65, %c0_66] : memref<16x256xf32, #tpu.memory_space<vmem>>, vector<16x256xf32>
    %cst_67 = arith.constant dense<0.000000e+00> : vector<16x256xf32>
    %100 = tpu.matmul %99, %96, %cst_67 {dimension_numbers = #tpu.dot_dimension_numbers<[1], [0], [0], [1], [0, 0, 1, 1], [], []>} : vector<16x256xf32>, vector<256x256xf32>, vector<16x256xf32> -> vector<16x256xf32>
    %101 = vector.broadcast %97 : vector<1x256xf32> to vector<16x256xf32>
    %102 = arith.addf %100, %101 : vector<16x256xf32>
    %103 = vector.extract_strided_slice %102 {offsets = [0, 0], sizes = [16, 128], strides = [1, 1]} : vector<16x256xf32> to vector<16x128xf32>
    %104 = vector.extract_strided_slice %102 {offsets = [0, 128], sizes = [16, 128], strides = [1, 1]} : vector<16x256xf32> to vector<16x128xf32>
    %105 = arith.mulf %103, %103 : vector<16x128xf32>
    %106 = arith.mulf %104, %104 : vector<16x128xf32>
    %107 = arith.addf %105, %106 : vector<16x128xf32>
    %cst_68 = arith.constant 9.99999996E-13 : f32
    %108 = vector.broadcast %cst_68 : f32 to vector<16x128xf32>
    %109 = arith.addf %107, %108 : vector<16x128xf32>
    %110 = math.rsqrt %109 : vector<16x128xf32>
    %111 = arith.mulf %107, %110 : vector<16x128xf32>
    %112 = vector.broadcast %98 : vector<1x128xf32> to vector<16x128xf32>
    %113 = arith.addf %111, %112 : vector<16x128xf32>
    %cst_69 = arith.constant 0.000000e+00 : f32
    %114 = vector.broadcast %cst_69 : f32 to vector<16x128xf32>
    %115 = arith.cmpf ogt, %113, %114 : vector<16x128xf32>
    %116 = vector.broadcast %98 : vector<1x128xf32> to vector<16x128xf32>
    %117 = arith.mulf %116, %110 : vector<16x128xf32>
    %cst_70 = arith.constant 1.000000e+00 : f32
    %118 = vector.broadcast %cst_70 : f32 to vector<16x128xf32>
    %119 = arith.addf %118, %117 : vector<16x128xf32>
    %cst_71 = arith.constant 0.000000e+00 : f32
    %120 = vector.broadcast %cst_71 : f32 to vector<16x128xf32>
    %121 = arith.select %115, %119, %120 : vector<16x128xi1>, vector<16x128xf32>
    %122 = arith.mulf %103, %121 : vector<16x128xf32>
    %c0_72 = arith.constant 0 : index
    %c0_73 = arith.constant 0 : index
    %123 = vector.load %arg21[%c0_72, %c0_73] : memref<16x256xf32, #tpu.memory_space<vmem>>, vector<16x128xf32>
    tpu.vector_store %arg21[%c0_72, %c0_73], %122 {strides = array<i32>} : memref<16x256xf32, #tpu.memory_space<vmem>>, vector<16x128xf32>,
    %124 = arith.mulf %104, %121 : vector<16x128xf32>
    %c0_74 = arith.constant 0 : index
    %c128_75 = arith.constant 128 : index
    %125 = vector.load %arg21[%c0_74, %c128_75] : memref<16x256xf32, #tpu.memory_space<vmem>>, vector<16x128xf32>
    tpu.vector_store %arg21[%c0_74, %c128_75], %124 {strides = array<i32>} : memref<16x256xf32, #tpu.memory_space<vmem>>, vector<16x128xf32>,
    %c0_76 = arith.constant 0 : index
    %c0_77 = arith.constant 0 : index
    %126 = vector.load %arg15[%c0_76, %c0_77] : memref<256x256xf32, #tpu.memory_space<vmem>>, vector<256x256xf32>
    %c0_78 = arith.constant 0 : index
    %c0_79 = arith.constant 0 : index
    %127 = vector.load %arg16[%c0_78, %c0_79] : memref<1x256xf32, #tpu.memory_space<vmem>>, vector<1x256xf32>
    %c0_80 = arith.constant 0 : index
    %c0_81 = arith.constant 0 : index
    %128 = vector.load %arg17[%c0_80, %c0_81] : memref<1x128xf32, #tpu.memory_space<vmem>>, vector<1x128xf32>
    %c0_82 = arith.constant 0 : index
    %c0_83 = arith.constant 0 : index
    %129 = vector.load %arg21[%c0_82, %c0_83] : memref<16x256xf32, #tpu.memory_space<vmem>>, vector<16x256xf32>
    %cst_84 = arith.constant dense<0.000000e+00> : vector<16x256xf32>
    %130 = tpu.matmul %129, %126, %cst_84 {dimension_numbers = #tpu.dot_dimension_numbers<[1], [0], [0], [1], [0, 0, 1, 1], [], []>} : vector<16x256xf32>, vector<256x256xf32>, vector<16x256xf32> -> vector<16x256xf32>
    %131 = vector.broadcast %127 : vector<1x256xf32> to vector<16x256xf32>
    %132 = arith.addf %130, %131 : vector<16x256xf32>
    %133 = vector.extract_strided_slice %132 {offsets = [0, 0], sizes = [16, 128], strides = [1, 1]} : vector<16x256xf32> to vector<16x128xf32>
    %134 = vector.extract_strided_slice %132 {offsets = [0, 128], sizes = [16, 128], strides = [1, 1]} : vector<16x256xf32> to vector<16x128xf32>
    %135 = arith.mulf %133, %133 : vector<16x128xf32>
    %136 = arith.mulf %134, %134 : vector<16x128xf32>
    %137 = arith.addf %135, %136 : vector<16x128xf32>
    %cst_85 = arith.constant 9.99999996E-13 : f32
    %138 = vector.broadcast %cst_85 : f32 to vector<16x128xf32>
    %139 = arith.addf %137, %138 : vector<16x128xf32>
    %140 = math.rsqrt %139 : vector<16x128xf32>
    %141 = arith.mulf %137, %140 : vector<16x128xf32>
    %142 = vector.broadcast %128 : vector<1x128xf32> to vector<16x128xf32>
    %143 = arith.addf %141, %142 : vector<16x128xf32>
    %cst_86 = arith.constant 0.000000e+00 : f32
    %144 = vector.broadcast %cst_86 : f32 to vector<16x128xf32>
    %145 = arith.cmpf ogt, %143, %144 : vector<16x128xf32>
    %146 = vector.broadcast %128 : vector<1x128xf32> to vector<16x128xf32>
    %147 = arith.mulf %146, %140 : vector<16x128xf32>
    %cst_87 = arith.constant 1.000000e+00 : f32
    %148 = vector.broadcast %cst_87 : f32 to vector<16x128xf32>
    %149 = arith.addf %148, %147 : vector<16x128xf32>
    %cst_88 = arith.constant 0.000000e+00 : f32
    %150 = vector.broadcast %cst_88 : f32 to vector<16x128xf32>
    %151 = arith.select %145, %149, %150 : vector<16x128xi1>, vector<16x128xf32>
    %152 = arith.mulf %133, %151 : vector<16x128xf32>
    %c0_89 = arith.constant 0 : index
    %c0_90 = arith.constant 0 : index
    %153 = vector.load %arg21[%c0_89, %c0_90] : memref<16x256xf32, #tpu.memory_space<vmem>>, vector<16x128xf32>
    tpu.vector_store %arg21[%c0_89, %c0_90], %152 {strides = array<i32>} : memref<16x256xf32, #tpu.memory_space<vmem>>, vector<16x128xf32>,
    %154 = arith.mulf %134, %151 : vector<16x128xf32>
    %c0_91 = arith.constant 0 : index
    %c128_92 = arith.constant 128 : index
    %155 = vector.load %arg21[%c0_91, %c128_92] : memref<16x256xf32, #tpu.memory_space<vmem>>, vector<16x128xf32>
    tpu.vector_store %arg21[%c0_91, %c128_92], %154 {strides = array<i32>} : memref<16x256xf32, #tpu.memory_space<vmem>>, vector<16x128xf32>,
    %c0_93 = arith.constant 0 : index
    %c0_94 = arith.constant 0 : index
    %156 = vector.load %arg18[%c0_93, %c0_94] : memref<256x256xf32, #tpu.memory_space<vmem>>, vector<256x256xf32>
    %c0_95 = arith.constant 0 : index
    %c0_96 = arith.constant 0 : index
    %157 = vector.load %arg19[%c0_95, %c0_96] : memref<1x256xf32, #tpu.memory_space<vmem>>, vector<1x256xf32>
    %c0_97 = arith.constant 0 : index
    %c0_98 = arith.constant 0 : index
    %158 = vector.load %arg21[%c0_97, %c0_98] : memref<16x256xf32, #tpu.memory_space<vmem>>, vector<16x256xf32>
    %cst_99 = arith.constant dense<0.000000e+00> : vector<16x256xf32>
    %159 = tpu.matmul %158, %156, %cst_99 {dimension_numbers = #tpu.dot_dimension_numbers<[1], [0], [0], [1], [0, 0, 1, 1], [], []>} : vector<16x256xf32>, vector<256x256xf32>, vector<16x256xf32> -> vector<16x256xf32>
    %160 = vector.broadcast %157 : vector<1x256xf32> to vector<16x256xf32>
    %161 = arith.addf %159, %160 : vector<16x256xf32>
    %162 = vector.extract_strided_slice %161 {offsets = [0, 0], sizes = [16, 128], strides = [1, 1]} : vector<16x256xf32> to vector<16x128xf32>
    %163 = vector.extract_strided_slice %161 {offsets = [0, 128], sizes = [16, 128], strides = [1, 1]} : vector<16x256xf32> to vector<16x128xf32>
    %164 = arith.mulf %162, %162 : vector<16x128xf32>
    %165 = arith.mulf %163, %163 : vector<16x128xf32>
    %166 = arith.addf %164, %165 : vector<16x128xf32>
    %cst_100 = arith.constant 9.99999996E-13 : f32
    %167 = vector.broadcast %cst_100 : f32 to vector<16x128xf32>
    %168 = arith.addf %166, %167 : vector<16x128xf32>
    %169 = math.rsqrt %168 : vector<16x128xf32>
    %170 = arith.mulf %166, %169 : vector<16x128xf32>
    %171 = arith.negf %170 : vector<16x128xf32>
    %172 = math.exp %171 : vector<16x128xf32>
    %cst_101 = arith.constant 1.000000e+00 : f32
    %173 = vector.broadcast %cst_101 : f32 to vector<16x128xf32>
    %174 = arith.addf %173, %172 : vector<16x128xf32>
    %175 = arith.divf %173, %174 : vector<16x128xf32>
    %176 = arith.mulf %175, %169 : vector<16x128xf32>
    %177 = arith.mulf %162, %176 : vector<16x128xf32>
    %c0_102 = arith.constant 0 : index
    %c0_103 = arith.constant 0 : index
    %178 = vector.load %arg20[%c0_102, %c0_103] : memref<16x256xf32, #tpu.memory_space<vmem>>, vector<16x128xf32>
    tpu.vector_store %arg20[%c0_102, %c0_103], %177 {strides = array<i32>} : memref<16x256xf32, #tpu.memory_space<vmem>>, vector<16x128xf32>,
    %179 = arith.mulf %163, %176 : vector<16x128xf32>
    %c0_104 = arith.constant 0 : index
    %c128_105 = arith.constant 128 : index
    %180 = vector.load %arg20[%c0_104, %c128_105] : memref<16x256xf32, #tpu.memory_space<vmem>>, vector<16x128xf32>
    tpu.vector_store %arg20[%c0_104, %c128_105], %179 {strides = array<i32>} : memref<16x256xf32, #tpu.memory_space<vmem>>, vector<16x128xf32>,
    return
  }
  func.func @transform_0(%arg0: i32) -> (i32, i32) {
    %c0_i32 = arith.constant 0 : i32
    %c0_i32_0 = arith.constant 0 : i32
    return %arg0, %c0_i32 : i32, i32
  }
  func.func @transform_1(%arg0: i32) -> (i32, i32) {
    %c0_i32 = arith.constant 0 : i32
    %c0_i32_0 = arith.constant 0 : i32
    return %arg0, %c0_i32 : i32, i32
  }
  func.func @transform_2(%arg0: i32) -> (i32, i32) {
    %c0_i32 = arith.constant 0 : i32
    %c0_i32_0 = arith.constant 0 : i32
    %c0_i32_1 = arith.constant 0 : i32
    return %c0_i32, %c0_i32_0 : i32, i32
  }
  func.func @transform_3(%arg0: i32) -> (i32, i32) {
    %c0_i32 = arith.constant 0 : i32
    %c0_i32_0 = arith.constant 0 : i32
    %c0_i32_1 = arith.constant 0 : i32
    return %c0_i32, %c0_i32_0 : i32, i32
  }
  func.func @transform_4(%arg0: i32) -> (i32, i32) {
    %c0_i32 = arith.constant 0 : i32
    %c0_i32_0 = arith.constant 0 : i32
    %c0_i32_1 = arith.constant 0 : i32
    return %c0_i32, %c0_i32_0 : i32, i32
  }
  func.func @transform_5(%arg0: i32) -> (i32, i32) {
    %c0_i32 = arith.constant 0 : i32
    %c0_i32_0 = arith.constant 0 : i32
    %c0_i32_1 = arith.constant 0 : i32
    return %c0_i32, %c0_i32_0 : i32, i32
  }
  func.func @transform_6(%arg0: i32) -> (i32, i32) {
    %c0_i32 = arith.constant 0 : i32
    %c0_i32_0 = arith.constant 0 : i32
    %c0_i32_1 = arith.constant 0 : i32
    return %c0_i32, %c0_i32_0 : i32, i32
  }
  func.func @transform_7(%arg0: i32) -> (i32, i32) {
    %c0_i32 = arith.constant 0 : i32
    %c0_i32_0 = arith.constant 0 : i32
    %c0_i32_1 = arith.constant 0 : i32
    return %c0_i32, %c0_i32_0 : i32, i32
  }
  func.func @transform_8(%arg0: i32) -> (i32, i32) {
    %c0_i32 = arith.constant 0 : i32
    %c0_i32_0 = arith.constant 0 : i32
    %c0_i32_1 = arith.constant 0 : i32
    return %c0_i32, %c0_i32_0 : i32, i32
  }
  func.func @transform_9(%arg0: i32) -> (i32, i32) {
    %c0_i32 = arith.constant 0 : i32
    %c0_i32_0 = arith.constant 0 : i32
    %c0_i32_1 = arith.constant 0 : i32
    return %c0_i32, %c0_i32_0 : i32, i32
  }
  func.func @transform_10(%arg0: i32) -> (i32, i32) {
    %c0_i32 = arith.constant 0 : i32
    %c0_i32_0 = arith.constant 0 : i32
    %c0_i32_1 = arith.constant 0 : i32
    return %c0_i32, %c0_i32_0 : i32, i32
  }
  func.func @transform_11(%arg0: i32) -> (i32, i32) {
    %c0_i32 = arith.constant 0 : i32
    %c0_i32_0 = arith.constant 0 : i32
    %c0_i32_1 = arith.constant 0 : i32
    return %c0_i32, %c0_i32_0 : i32, i32
  }
  func.func @transform_12(%arg0: i32) -> (i32, i32) {
    %c0_i32 = arith.constant 0 : i32
    %c0_i32_0 = arith.constant 0 : i32
    %c0_i32_1 = arith.constant 0 : i32
    return %c0_i32, %c0_i32_0 : i32, i32
  }
  func.func @transform_13(%arg0: i32) -> (i32, i32) {
    %c0_i32 = arith.constant 0 : i32
    %c0_i32_0 = arith.constant 0 : i32
    %c0_i32_1 = arith.constant 0 : i32
    return %c0_i32, %c0_i32_0 : i32, i32
  }
  func.func @transform_14(%arg0: i32) -> (i32, i32) {
    %c0_i32 = arith.constant 0 : i32
    %c0_i32_0 = arith.constant 0 : i32
    %c0_i32_1 = arith.constant 0 : i32
    return %c0_i32, %c0_i32_0 : i32, i32
  }
  func.func @transform_15(%arg0: i32) -> (i32, i32) {
    %c0_i32 = arith.constant 0 : i32
    %c0_i32_0 = arith.constant 0 : i32
    %c0_i32_1 = arith.constant 0 : i32
    return %c0_i32, %c0_i32_0 : i32, i32
  }
  func.func @transform_16(%arg0: i32) -> (i32, i32) {
    %c0_i32 = arith.constant 0 : i32
    %c0_i32_0 = arith.constant 0 : i32
    %c0_i32_1 = arith.constant 0 : i32
    return %c0_i32, %c0_i32_0 : i32, i32
  }
  func.func @transform_17(%arg0: i32) -> (i32, i32) {
    %c0_i32 = arith.constant 0 : i32
    %c0_i32_0 = arith.constant 0 : i32
    %c0_i32_1 = arith.constant 0 : i32
    return %c0_i32, %c0_i32_0 : i32, i32
  }
  func.func @transform_18(%arg0: i32) -> (i32, i32) {
    %c0_i32 = arith.constant 0 : i32
    %c0_i32_0 = arith.constant 0 : i32
    %c0_i32_1 = arith.constant 0 : i32
    return %c0_i32, %c0_i32_0 : i32, i32
  }
  func.func @transform_19(%arg0: i32) -> (i32, i32) {
    %c0_i32 = arith.constant 0 : i32
    %c0_i32_0 = arith.constant 0 : i32
    return %arg0, %c0_i32 : i32, i32
  }
}

</mosaic_0001>

<llo_original>
// kernel: tpu_custom_call.1
$region0: #{tpu_custom_call.1}
  #allocation0 [shape = 'u32[]', space=smem, size = 0x4, offset = 0x4, fixed_abs, tag = 'smem constant byte address 0x4 - core index']
  #allocation1 [shape = 'u32[72,128]{1,0:T(1,128)}', space=vmem, size = 0x9000, scoped, tag = 'internal scratch']
  #allocation2 [shape = 'f32[16,256]{1,0:T(8,128)}', space=vmem, size = 0x4000, scoped, tag = 'scratch operand']
  %s0 = inlined_call_operand.hbm [shape: f32[16,16], index: 0, kind: input, shape index: {}]
  %s1 = inlined_call_operand.hbm [shape: f32[16,16], index: 1, kind: input, shape index: {}]
  %s2 = inlined_call_operand.hbm [shape: f32[256,256], index: 2, kind: input, shape index: {}]
  %s3 = inlined_call_operand.vmem [shape: f32[1,256], index: 3, kind: input, shape index: {}]
  %s4 = inlined_call_operand.hbm [shape: f32[1,128], index: 4, kind: input, shape index: {}]
  %s5 = inlined_call_operand.hbm [shape: f32[256,256], index: 5, kind: input, shape index: {}]
  %s6 = inlined_call_operand.vmem [shape: f32[1,256], index: 6, kind: input, shape index: {}]
  %s7 = inlined_call_operand.hbm [shape: f32[1,128], index: 7, kind: input, shape index: {}]
  %s8 = inlined_call_operand.hbm [shape: f32[256,256], index: 8, kind: input, shape index: {}]
  %s9 = inlined_call_operand.vmem [shape: f32[1,256], index: 9, kind: input, shape index: {}]
  %s10 = inlined_call_operand.hbm [shape: f32[1,128], index: 10, kind: input, shape index: {}]
  %s11 = inlined_call_operand.hbm [shape: f32[256,256], index: 11, kind: input, shape index: {}]
  %s12 = inlined_call_operand.vmem [shape: f32[1,256], index: 12, kind: input, shape index: {}]
  %s13 = inlined_call_operand.hbm [shape: f32[1,128], index: 13, kind: input, shape index: {}]
  %s14 = inlined_call_operand.hbm [shape: f32[256,256], index: 14, kind: input, shape index: {}]
  %s15 = inlined_call_operand.vmem [shape: f32[1,256], index: 15, kind: input, shape index: {}]
  %s16 = inlined_call_operand.vmem [shape: f32[1,128], index: 16, kind: input, shape index: {}]
  %s17 = inlined_call_operand.hbm [shape: f32[256,256], index: 17, kind: input, shape index: {}]
  %s18 = inlined_call_operand.vmem [shape: f32[1,256], index: 18, kind: input, shape index: {}]
  %s19 = inlined_call_operand.hbm [shape: f32[16,256], index: 19, kind: output, shape index: {}]
  %s20 = sld [smem:[#allocation0]]
  $region134: #{tpu_custom_call.1} parent=0
    _
  %s22 = ssub.s32 1, %s20
  %s23 = scalar_select 0, %s22, %s20
  $region1: #{tpu_custom_call.1} parent=0
    #allocation3 [shape = 'u8[8192]{0}', space=vmem, size = 0x2000, scoped, tag = 'input window, operand 0, single buffered']
    #allocation4 [shape = 's32[1]{0}', space=sflag, size = 0x4, scoped, tag = 'scoped memory for tpu_custom_call.1']
    #allocation5 [shape = 's32[1]{0}', space=sflag, size = 0x4, scoped, tag = 'scoped memory for tpu_custom_call.1']
    #allocation6 [shape = 'u8[8192]{0}', space=vmem, size = 0x2000, scoped, tag = 'input window, operand 1, single buffered']
    #allocation7 [shape = 's32[1]{0}', space=sflag, size = 0x4, scoped, tag = 'scoped memory for tpu_custom_call.1']
    #allocation8 [shape = 'u8[262144]{0}', space=vmem, size = 0x40000, scoped, tag = 'input window, operand 2, single buffered']
    #allocation9 [shape = 'u8[512]{0}', space=vmem, size = 0x400, scoped, tag = 'input window, operand 4, single buffered']
    #allocation10 [shape = 's32[1]{0}', space=sflag, size = 0x4, scoped, tag = 'scoped memory for tpu_custom_call.1']
    #allocation11 [shape = 'u8[262144]{0}', space=vmem, size = 0x40000, scoped, tag = 'input window, operand 5, single buffered']
    #allocation12 [shape = 'u8[512]{0}', space=vmem, size = 0x400, scoped, tag = 'input window, operand 7, single buffered']
    #allocation13 [shape = 's32[1]{0}', space=sflag, size = 0x4, scoped, tag = 'scoped memory for tpu_custom_call.1']
    #allocation14 [shape = 'u8[262144]{0}', space=vmem, size = 0x40000, scoped, tag = 'input window, operand 8, single buffered']
    #allocation15 [shape = 'u8[512]{0}', space=vmem, size = 0x400, scoped, tag = 'input window, operand 10, single buffered']
    #allocation16 [shape = 's32[1]{0}', space=sflag, size = 0x4, scoped, tag = 'scoped memory for tpu_custom_call.1']
    #allocation17 [shape = 'u8[262144]{0}', space=vmem, size = 0x40000, scoped, tag = 'input window, operand 11, single buffered']
    #allocation18 [shape = 'u8[512]{0}', space=vmem, size = 0x400, scoped, tag = 'input window, operand 13, single buffered']
    #allocation19 [shape = 's32[1]{0}', space=sflag, size = 0x4, scoped, tag = 'scoped memory for tpu_custom_call.1']
    #allocation20 [shape = 'u8[262144]{0}', space=vmem, size = 0x40000, scoped, tag = 'input window, operand 14, single buffered']
    #allocation21 [shape = 'u8[262144]{0}', space=vmem, size = 0x40000, scoped, tag = 'input window, operand 17, single buffered']
    #allocation22 [shape = 's32[1]{0}', space=sflag, size = 0x4, scoped, tag = 'scoped memory for tpu_custom_call.1']
    #allocation23 [shape = 'u8[16384]{0}', space=vmem, size = 0x4000, scoped, tag = 'output window, operand 0, single buffered']
    %24 = vsyncpa [#allocation4], 0
    %25 = vsyncpa [#allocation7], 0
    %26 = vsyncpa [#allocation10], 0
    %27 = vsyncpa [#allocation13], 0
    %28 = vsyncpa [#allocation16], 0
    %29 = vsyncpa [#allocation19], 0
    %30 = vsyncpa [#allocation22], 0
    %31 = vsyncpa [#allocation5], 0
    // Predicated region
    $region2: #{tpu_custom_call.1} parent=1 // pred_check
      _
    $region3: #{tpu_custom_call.1} parent=1 // pred_check_branch
      %33 = sbr.rel (0) target = $region5
    $region4: #{tpu_custom_call.1} parent=1 // pred_region
      %35 = vsyncadd [#allocation4], 0
      %s36 = sshll.u32 %s0, 4
      %s37 = int_to_ptr.hbm [resolvable:$true] %s36
      %s38 = sshll.u32 [#allocation3], 4
      %s39 = int_to_ptr.vmem [resolvable:$true] %s38
      %44 = dma.hbm_to_vmem [thread:$0]  %s37, 256, %s39, [#allocation4], 128, 128, 8
    $region5: #{tpu_custom_call.1} parent=1 // pred_fallthru
      _
    // Predicated region
    $region6: #{tpu_custom_call.1} parent=1 // pred_check
      _
    $region7: #{tpu_custom_call.1} parent=1 // pred_check_branch
      %46 = sbr.rel (0) target = $region9
    $region8: #{tpu_custom_call.1} parent=1 // pred_region
      %48 = vsyncadd [#allocation7], 0
      %s49 = sshll.u32 %s1, 4
      %s50 = int_to_ptr.hbm [resolvable:$true] %s49
      %s51 = sshll.u32 [#allocation6], 4
      %s52 = int_to_ptr.vmem [resolvable:$true] %s51
      %57 = dma.hbm_to_vmem [thread:$0]  %s50, 256, %s52, [#allocation7], 128, 128, 8
    $region9: #{tpu_custom_call.1} parent=1 // pred_fallthru
      _
    // Predicated region
    $region10: #{tpu_custom_call.1} parent=1 // pred_check
      _
    $region11: #{tpu_custom_call.1} parent=1 // pred_check_branch
      %59 = sbr.rel (0) target = $region13
    $region12: #{tpu_custom_call.1} parent=1 // pred_region
      %61 = vsyncadd [#allocation7], 0
      %s62 = sshll.u32 %s2, 4
      %s63 = int_to_ptr.hbm [resolvable:$true] %s62
      %s64 = sshll.u32 [#allocation8], 4
      %s65 = int_to_ptr.vmem [resolvable:$true] %s64
      %70 = dma.hbm_to_vmem [thread:$0]  %s63, 8192, %s65, [#allocation7], 256, 256, 16
    $region13: #{tpu_custom_call.1} parent=1 // pred_fallthru
      _
    // Predicated region
    $region14: #{tpu_custom_call.1} parent=1 // pred_check
      _
    $region15: #{tpu_custom_call.1} parent=1 // pred_check_branch
      %72 = sbr.rel (0) target = $region17
    $region16: #{tpu_custom_call.1} parent=1 // pred_region
      _
    $region17: #{tpu_custom_call.1} parent=1 // pred_fallthru
      _
    // Predicated region
    $region18: #{tpu_custom_call.1} parent=1 // pred_check
      _
    $region19: #{tpu_custom_call.1} parent=1 // pred_check_branch
      %74 = sbr.rel (0) target = $region21
    $region20: #{tpu_custom_call.1} parent=1 // pred_region
      %76 = vsyncadd [#allocation10], 0
      %s78 = sshll.u32 %s4, 4
      %s79 = int_to_ptr.hbm [resolvable:$true] %s78
      %s80 = sshll.u32 [#allocation9], 4
      %s81 = int_to_ptr.vmem [resolvable:$true] %s80
      %83 = dma.hbm_to_vmem [thread:$0]  %s79, 16, %s81, [#allocation10]
    $region21: #{tpu_custom_call.1} parent=1 // pred_fallthru
      _
    // Predicated region
    $region22: #{tpu_custom_call.1} parent=1 // pred_check
      _
    $region23: #{tpu_custom_call.1} parent=1 // pred_check_branch
      %85 = sbr.rel (0) target = $region25
    $region24: #{tpu_custom_call.1} parent=1 // pred_region
      %87 = vsyncadd [#allocation10], 0
      %s88 = sshll.u32 %s5, 4
      %s89 = int_to_ptr.hbm [resolvable:$true] %s88
      %s90 = sshll.u32 [#allocation11], 4
      %s91 = int_to_ptr.vmem [resolvable:$true] %s90
      %96 = dma.hbm_to_vmem [thread:$0]  %s89, 8192, %s91, [#allocation10], 256, 256, 16
    $region25: #{tpu_custom_call.1} parent=1 // pred_fallthru
      _
    // Predicated region
    $region26: #{tpu_custom_call.1} parent=1 // pred_check
      _
    $region27: #{tpu_custom_call.1} parent=1 // pred_check_branch
      %98 = sbr.rel (0) target = $region29
    $region28: #{tpu_custom_call.1} parent=1 // pred_region
      _
    $region29: #{tpu_custom_call.1} parent=1 // pred_fallthru
      _
    // Predicated region
    $region30: #{tpu_custom_call.1} parent=1 // pred_check
      _
    $region31: #{tpu_custom_call.1} parent=1 // pred_check_branch
      %100 = sbr.rel (0) target = $region33
    $region32: #{tpu_custom_call.1} parent=1 // pred_region
      %102 = vsyncadd [#allocation13], 0
      %s104 = sshll.u32 %s7, 4
      %s105 = int_to_ptr.hbm [resolvable:$true] %s104
      %s106 = sshll.u32 [#allocation12], 4
      %s107 = int_to_ptr.vmem [resolvable:$true] %s106
      %109 = dma.hbm_to_vmem [thread:$0]  %s105, 16, %s107, [#allocation13]
    $region33: #{tpu_custom_call.1} parent=1 // pred_fallthru
      _
    // Predicated region
    $region34: #{tpu_custom_call.1} parent=1 // pred_check
      _
    $region35: #{tpu_custom_call.1} parent=1 // pred_check_branch
      %111 = sbr.rel (0) target = $region37
    $region36: #{tpu_custom_call.1} parent=1 // pred_region
      %113 = vsyncadd [#allocation13], 0
      %s114 = sshll.u32 %s8, 4
      %s115 = int_to_ptr.hbm [resolvable:$true] %s114
      %s116 = sshll.u32 [#allocation14], 4
      %s117 = int_to_ptr.vmem [resolvable:$true] %s116
      %122 = dma.hbm_to_vmem [thread:$0]  %s115, 8192, %s117, [#allocation13], 256, 256, 16
    $region37: #{tpu_custom_call.1} parent=1 // pred_fallthru
      _
    // Predicated region
    $region38: #{tpu_custom_call.1} parent=1 // pred_check
      _
    $region39: #{tpu_custom_call.1} parent=1 // pred_check_branch
      %124 = sbr.rel (0) target = $region41
    $region40: #{tpu_custom_call.1} parent=1 // pred_region
      _
    $region41: #{tpu_custom_call.1} parent=1 // pred_fallthru
      _
    // Predicated region
    $region42: #{tpu_custom_call.1} parent=1 // pred_check
      _
    $region43: #{tpu_custom_call.1} parent=1 // pred_check_branch
      %126 = sbr.rel (0) target = $region45
    $region44: #{tpu_custom_call.1} parent=1 // pred_region
      %128 = vsyncadd [#allocation16], 0
      %s130 = sshll.u32 %s10, 4
      %s131 = int_to_ptr.hbm [resolvable:$true] %s130
      %s132 = sshll.u32 [#allocation15], 4
      %s133 = int_to_ptr.vmem [resolvable:$true] %s132
      %135 = dma.hbm_to_vmem [thread:$0]  %s131, 16, %s133, [#allocation16]
    $region45: #{tpu_custom_call.1} parent=1 // pred_fallthru
      _
    // Predicated region
    $region46: #{tpu_custom_call.1} parent=1 // pred_check
      _
    $region47: #{tpu_custom_call.1} parent=1 // pred_check_branch
      %137 = sbr.rel (0) target = $region49
    $region48: #{tpu_custom_call.1} parent=1 // pred_region
      %139 = vsyncadd [#allocation16], 0
      %s140 = sshll.u32 %s11, 4
      %s141 = int_to_ptr.hbm [resolvable:$true] %s140
      %s142 = sshll.u32 [#allocation17], 4
      %s143 = int_to_ptr.vmem [resolvable:$true] %s142
      %148 = dma.hbm_to_vmem [thread:$0]  %s141, 8192, %s143, [#allocation16], 256, 256, 16
    $region49: #{tpu_custom_call.1} parent=1 // pred_fallthru
      _
    // Predicated region
    $region50: #{tpu_custom_call.1} parent=1 // pred_check
      _
    $region51: #{tpu_custom_call.1} parent=1 // pred_check_branch
      %150 = sbr.rel (0) target = $region53
    $region52: #{tpu_custom_call.1} parent=1 // pred_region
      _
    $region53: #{tpu_custom_call.1} parent=1 // pred_fallthru
      _
    // Predicated region
    $region54: #{tpu_custom_call.1} parent=1 // pred_check
      _
    $region55: #{tpu_custom_call.1} parent=1 // pred_check_branch
      %152 = sbr.rel (0) target = $region57
    $region56: #{tpu_custom_call.1} parent=1 // pred_region
      %154 = vsyncadd [#allocation19], 0
      %s156 = sshll.u32 %s13, 4
      %s157 = int_to_ptr.hbm [resolvable:$true] %s156
      %s158 = sshll.u32 [#allocation18], 4
      %s159 = int_to_ptr.vmem [resolvable:$true] %s158
      %161 = dma.hbm_to_vmem [thread:$0]  %s157, 16, %s159, [#allocation19]
    $region57: #{tpu_custom_call.1} parent=1 // pred_fallthru
      _
    // Predicated region
    $region58: #{tpu_custom_call.1} parent=1 // pred_check
      _
    $region59: #{tpu_custom_call.1} parent=1 // pred_check_branch
      %163 = sbr.rel (0) target = $region61
    $region60: #{tpu_custom_call.1} parent=1 // pred_region
      %165 = vsyncadd [#allocation19], 0
      %s166 = sshll.u32 %s14, 4
      %s167 = int_to_ptr.hbm [resolvable:$true] %s166
      %s168 = sshll.u32 [#allocation20], 4
      %s169 = int_to_ptr.vmem [resolvable:$true] %s168
      %174 = dma.hbm_to_vmem [thread:$0]  %s167, 8192, %s169, [#allocation19], 256, 256, 16
    $region61: #{tpu_custom_call.1} parent=1 // pred_fallthru
      _
    // Predicated region
    $region62: #{tpu_custom_call.1} parent=1 // pred_check
      _
    $region63: #{tpu_custom_call.1} parent=1 // pred_check_branch
      %176 = sbr.rel (0) target = $region65
    $region64: #{tpu_custom_call.1} parent=1 // pred_region
      _
    $region65: #{tpu_custom_call.1} parent=1 // pred_fallthru
      _
    // Predicated region
    $region66: #{tpu_custom_call.1} parent=1 // pred_check
      _
    $region67: #{tpu_custom_call.1} parent=1 // pred_check_branch
      %178 = sbr.rel (0) target = $region69
    $region68: #{tpu_custom_call.1} parent=1 // pred_region
      _
    $region69: #{tpu_custom_call.1} parent=1 // pred_fallthru
      _
    // Predicated region
    $region70: #{tpu_custom_call.1} parent=1 // pred_check
      _
    $region71: #{tpu_custom_call.1} parent=1 // pred_check_branch
      %180 = sbr.rel (0) target = $region73
    $region72: #{tpu_custom_call.1} parent=1 // pred_region
      %182 = vsyncadd [#allocation22], 0
      %s183 = sshll.u32 %s17, 4
      %s184 = int_to_ptr.hbm [resolvable:$true] %s183
      %s185 = sshll.u32 [#allocation21], 4
      %s186 = int_to_ptr.vmem [resolvable:$true] %s185
      %191 = dma.hbm_to_vmem [thread:$0]  %s184, 8192, %s186, [#allocation22], 256, 256, 16
    $region73: #{tpu_custom_call.1} parent=1 // pred_fallthru
      _
    // Predicated region
    $region74: #{tpu_custom_call.1} parent=1 // pred_check
      _
    $region75: #{tpu_custom_call.1} parent=1 // pred_check_branch
      %193 = sbr.rel (0) target = $region77
    $region76: #{tpu_custom_call.1} parent=1 // pred_region
      _
    $region77: #{tpu_custom_call.1} parent=1 // pred_fallthru
      _
    // Predicated region
    $region78: #{tpu_custom_call.1} parent=1 // pred_check
      _
    $region79: #{tpu_custom_call.1} parent=1 // pred_check_branch
      %195 = sbr.rel (0) target = $region81
    $region80: #{tpu_custom_call.1} parent=1 // pred_region
      %197 = dma.done [#allocation4], 256
    $region81: #{tpu_custom_call.1} parent=1 // pred_fallthru
      _
    // Predicated region
    $region82: #{tpu_custom_call.1} parent=1 // pred_check
      _
    $region83: #{tpu_custom_call.1} parent=1 // pred_check_branch
      %199 = sbr.rel (0) target = $region85
    $region84: #{tpu_custom_call.1} parent=1 // pred_region
      %201 = dma.done [#allocation7], 256
    $region85: #{tpu_custom_call.1} parent=1 // pred_fallthru
      _
    // Predicated region
    $region86: #{tpu_custom_call.1} parent=1 // pred_check
      _
    $region87: #{tpu_custom_call.1} parent=1 // pred_check_branch
      %203 = sbr.rel (0) target = $region89
    $region88: #{tpu_custom_call.1} parent=1 // pred_region
      %205 = dma.done [#allocation7], 8192
    $region89: #{tpu_custom_call.1} parent=1 // pred_fallthru
      _
    // Predicated region
    $region90: #{tpu_custom_call.1} parent=1 // pred_check
      _
    $region91: #{tpu_custom_call.1} parent=1 // pred_check_branch
      %207 = sbr.rel (0) target = $region93
    $region92: #{tpu_custom_call.1} parent=1 // pred_region
      %209 = dma.done [#allocation10], 16
    $region93: #{tpu_custom_call.1} parent=1 // pred_fallthru
      _
    // Predicated region
    $region94: #{tpu_custom_call.1} parent=1 // pred_check
      _
    $region95: #{tpu_custom_call.1} parent=1 // pred_check_branch
      %211 = sbr.rel (0) target = $region97
    $region96: #{tpu_custom_call.1} parent=1 // pred_region
      %213 = dma.done [#allocation10], 8192
    $region97: #{tpu_custom_call.1} parent=1 // pred_fallthru
      _
    // Predicated region
    $region98: #{tpu_custom_call.1} parent=1 // pred_check
      _
    $region99: #{tpu_custom_call.1} parent=1 // pred_check_branch
      %215 = sbr.rel (0) target = $region101
    $region100: #{tpu_custom_call.1} parent=1 // pred_region
      %217 = dma.done [#allocation13], 16
    $region101: #{tpu_custom_call.1} parent=1 // pred_fallthru
      _
    // Predicated region
    $region102: #{tpu_custom_call.1} parent=1 // pred_check
      _
    $region103: #{tpu_custom_call.1} parent=1 // pred_check_branch
      %219 = sbr.rel (0) target = $region105
    $region104: #{tpu_custom_call.1} parent=1 // pred_region
      %221 = dma.done [#allocation13], 8192
    $region105: #{tpu_custom_call.1} parent=1 // pred_fallthru
      _
    // Predicated region
    $region106: #{tpu_custom_call.1} parent=1 // pred_check
      _
    $region107: #{tpu_custom_call.1} parent=1 // pred_check_branch
      %223 = sbr.rel (0) target = $region109
    $region108: #{tpu_custom_call.1} parent=1 // pred_region
      %225 = dma.done [#allocation16], 16
    $region109: #{tpu_custom_call.1} parent=1 // pred_fallthru
      _
    // Predicated region
    $region110: #{tpu_custom_call.1} parent=1 // pred_check
      _
    $region111: #{tpu_custom_call.1} parent=1 // pred_check_branch
      %227 = sbr.rel (0) target = $region113
    $region112: #{tpu_custom_call.1} parent=1 // pred_region
      %229 = dma.done [#allocation16], 8192
    $region113: #{tpu_custom_call.1} parent=1 // pred_fallthru
      _
    // Predicated region
    $region114: #{tpu_custom_call.1} parent=1 // pred_check
      _
    $region115: #{tpu_custom_call.1} parent=1 // pred_check_branch
      %231 = sbr.rel (0) target = $region117
    $region116: #{tpu_custom_call.1} parent=1 // pred_region
      %233 = dma.done [#allocation19], 16
    $region117: #{tpu_custom_call.1} parent=1 // pred_fallthru
      _
    // Predicated region
    $region118: #{tpu_custom_call.1} parent=1 // pred_check
      _
    $region119: #{tpu_custom_call.1} parent=1 // pred_check_branch
      %235 = sbr.rel (0) target = $region121
    $region120: #{tpu_custom_call.1} parent=1 // pred_region
      %237 = dma.done [#allocation19], 8192
    $region121: #{tpu_custom_call.1} parent=1 // pred_fallthru
      _
    // Predicated region
    $region122: #{tpu_custom_call.1} parent=1 // pred_check
      _
    $region123: #{tpu_custom_call.1} parent=1 // pred_check_branch
      %239 = sbr.rel (0) target = $region125
    $region124: #{tpu_custom_call.1} parent=1 // pred_region
      %241 = dma.done [#allocation22], 8192
    $region125: #{tpu_custom_call.1} parent=1 // pred_fallthru
      _
    %242 = vst [vmem:[#allocation2] sm:$0xff] 0.0
    %243 = vst [vmem:[#allocation2 + $0x8] sm:$0xff] 0.0
    %244 = vst [vmem:[#allocation2 + $0x10] sm:$0xff] 0.0
    %245 = vst [vmem:[#allocation2 + $0x18] sm:$0xff] 0.0
    %v246 = vld [vmem:[#allocation3] sm:$0xff]
    %v247 = vld [vmem:[#allocation3 + $0x8] sm:$0xff]
    %vm248 = vcmask 130048
    %249 = vst.msk [vmem:[#allocation2] sm:$0xff] %vm248, %v246
    %250 = vst.msk [vmem:[#allocation2 + $0x10] sm:$0xff] %vm248, %v247
    %v251 = vld [vmem:[#allocation6] sm:$0xff]
    %v252 = vld [vmem:[#allocation6 + $0x8] sm:$0xff]
    %253 = vst.msk [vmem:[#allocation2 + $0x8] sm:$0xff] %vm248, %v251
    %254 = vst.msk [vmem:[#allocation2 + $0x18] sm:$0xff] %vm248, %v252
    %v255 = vld [vmem:[#allocation8] sm:$0xff]
    %v256 = vld [vmem:[#allocation8 + $0x8] sm:$0xff]
    %v257 = vld [vmem:[#allocation8 + $0x10] sm:$0xff]
    %v258 = vld [vmem:[#allocation8 + $0x18] sm:$0xff]
    %v259 = vld [vmem:[#allocation8 + $0x20] sm:$0xff]
    %v260 = vld [vmem:[#allocation8 + $0x28] sm:$0xff]
    %v261 = vld [vmem:[#allocation8 + $0x30] sm:$0xff]
    %v262 = vld [vmem:[#allocation8 + $0x38] sm:$0xff]
    %v263 = vld [vmem:[#allocation8 + $0x40] sm:$0xff]
    %v264 = vld [vmem:[#allocation8 + $0x48] sm:$0xff]
    %v265 = vld [vmem:[#allocation8 + $0x50] sm:$0xff]
    %v266 = vld [vmem:[#allocation8 + $0x58] sm:$0xff]
    %v267 = vld [vmem:[#allocation8 + $0x60] sm:$0xff]
    %v268 = vld [vmem:[#allocation8 + $0x68] sm:$0xff]
    %v269 = vld [vmem:[#allocation8 + $0x70] sm:$0xff]
    %v270 = vld [vmem:[#allocation8 + $0x78] sm:$0xff]
    %v271 = vld [vmem:[#allocation8 + $0x80] sm:$0xff]
    %v272 = vld [vmem:[#allocation8 + $0x88] sm:$0xff]
    %v273 = vld [vmem:[#allocation8 + $0x90] sm:$0xff]
    %v274 = vld [vmem:[#allocation8 + $0x98] sm:$0xff]
    %v275 = vld [vmem:[#allocation8 + $0xa0] sm:$0xff]
    %v276 = vld [vmem:[#allocation8 + $0xa8] sm:$0xff]
    %v277 = vld [vmem:[#allocation8 + $0xb0] sm:$0xff]
    %v278 = vld [vmem:[#allocation8 + $0xb8] sm:$0xff]
    %v279 = vld [vmem:[#allocation8 + $0xc0] sm:$0xff]
    %v280 = vld [vmem:[#allocation8 + $0xc8] sm:$0xff]
    %v281 = vld [vmem:[#allocation8 + $0xd0] sm:$0xff]
    %v282 = vld [vmem:[#allocation8 + $0xd8] sm:$0xff]
    %v283 = vld [vmem:[#allocation8 + $0xe0] sm:$0xff]
    %v284 = vld [vmem:[#allocation8 + $0xe8] sm:$0xff]
    %v285 = vld [vmem:[#allocation8 + $0xf0] sm:$0xff]
    %v286 = vld [vmem:[#allocation8 + $0xf8] sm:$0xff]
    %v287 = vld [vmem:[#allocation8 + $0x100] sm:$0xff]
    %v288 = vld [vmem:[#allocation8 + $0x108] sm:$0xff]
    %v289 = vld [vmem:[#allocation8 + $0x110] sm:$0xff]
    %v290 = vld [vmem:[#allocation8 + $0x118] sm:$0xff]
    %v291 = vld [vmem:[#allocation8 + $0x120] sm:$0xff]
    %v292 = vld [vmem:[#allocation8 + $0x128] sm:$0xff]
    %v293 = vld [vmem:[#allocation8 + $0x130] sm:$0xff]
    %v294 = vld [vmem:[#allocation8 + $0x138] sm:$0xff]
    %v295 = vld [vmem:[#allocation8 + $0x140] sm:$0xff]
    %v296 = vld [vmem:[#allocation8 + $0x148] sm:$0xff]
    %v297 = vld [vmem:[#allocation8 + $0x150] sm:$0xff]
    %v298 = vld [vmem:[#allocation8 + $0x158] sm:$0xff]
    %v299 = vld [vmem:[#allocation8 + $0x160] sm:$0xff]
    %v300 = vld [vmem:[#allocation8 + $0x168] sm:$0xff]
    %v301 = vld [vmem:[#allocation8 + $0x170] sm:$0xff]
    %v302 = vld [vmem:[#allocation8 + $0x178] sm:$0xff]
    %v303 = vld [vmem:[#allocation8 + $0x180] sm:$0xff]
    %v304 = vld [vmem:[#allocation8 + $0x188] sm:$0xff]
    %v305 = vld [vmem:[#allocation8 + $0x190] sm:$0xff]
    %v306 = vld [vmem:[#allocation8 + $0x198] sm:$0xff]
    %v307 = vld [vmem:[#allocation8 + $0x1a0] sm:$0xff]
    %v308 = vld [vmem:[#allocation8 + $0x1a8] sm:$0xff]
    %v309 = vld [vmem:[#allocation8 + $0x1b0] sm:$0xff]
    %v310 = vld [vmem:[#allocation8 + $0x1b8] sm:$0xff]
    %v311 = vld [vmem:[#allocation8 + $0x1c0] sm:$0xff]
    %v312 = vld [vmem:[#allocation8 + $0x1c8] sm:$0xff]
    %v313 = vld [vmem:[#allocation8 + $0x1d0] sm:$0xff]
    %v314 = vld [vmem:[#allocation8 + $0x1d8] sm:$0xff]
    %v315 = vld [vmem:[#allocation8 + $0x1e0] sm:$0xff]
    %v316 = vld [vmem:[#allocation8 + $0x1e8] sm:$0xff]
    %v317 = vld [vmem:[#allocation8 + $0x1f0] sm:$0xff]
    %v318 = vld [vmem:[#allocation8 + $0x1f8] sm:$0xff]
    %v319 = vld [vmem:[%s3] sm:$0x3]
    %v320 = vld [vmem:[#allocation9] sm:$0x1]
    %v321 = vld [vmem:[#allocation2] sm:$0xff]
    %v322 = vld [vmem:[#allocation2 + $0x8] sm:$0xff]
    %v323 = vld [vmem:[#allocation2 + $0x10] sm:$0xff]
    %v324 = vld [vmem:[#allocation2 + $0x18] sm:$0xff]
    %v326 = vperm.slane %v319, 0
    %v327 = vperm.slane %v319, 1
    %330 = vmatpush.msra.mxu0 %v285
    %331 = vmatpush.msra.mxu0 %v283
    %332 = vmatpush.msra.mxu0 %v281
    %333 = vmatpush.msra.mxu0 %v279
    %334 = vmatpush.msra.mxu0 %v277
    %335 = vmatpush.msra.mxu0 %v275
    %336 = vmatpush.msra.mxu0 %v273
    %337 = vmatpush.msra.mxu0 %v271
    %338 = vmatpush.msra.mxu0 %v269
    %339 = vmatpush.msra.mxu0 %v267
    %340 = vmatpush.msra.mxu0 %v265
    %341 = vmatpush.msra.mxu0 %v263
    %342 = vmatpush.msra.mxu0 %v261
    %343 = vmatpush.msra.mxu0 %v259
    %344 = vmatpush.msra.mxu0 %v257
    %345 = vmatpush.msra.mxu0 %v255
    %346 = vmatmul.f32.gmra.mxu0 %v321
    %v347 = vpop.f32.mrf.mxu0
    %v348 = vadd.f32 %v326, %v347
    %349 = vmatmul.f32.gmra.mxu0 %v323
    %v350 = vpop.f32.mrf.mxu0
    %v351 = vadd.f32 %v326, %v350
    %352 = vdwg.mxu0
    %353 = vmatpush.msra.mxu0 %v317
    %354 = vmatpush.msra.mxu0 %v315
    %355 = vmatpush.msra.mxu0 %v313
    %356 = vmatpush.msra.mxu0 %v311
    %357 = vmatpush.msra.mxu0 %v309
    %358 = vmatpush.msra.mxu0 %v307
    %359 = vmatpush.msra.mxu0 %v305
    %360 = vmatpush.msra.mxu0 %v303
    %361 = vmatpush.msra.mxu0 %v301
    %362 = vmatpush.msra.mxu0 %v299
    %363 = vmatpush.msra.mxu0 %v297
    %364 = vmatpush.msra.mxu0 %v295
    %365 = vmatpush.msra.mxu0 %v293
    %366 = vmatpush.msra.mxu0 %v291
    %367 = vmatpush.msra.mxu0 %v289
    %368 = vmatpush.msra.mxu0 %v287
    %369 = vmatmul.f32.gmra.mxu0 %v322
    %v370 = vpop.f32.mrf.mxu0
    %v371 = vadd.f32 %v348, %v370
    %372 = vmatmul.f32.gmra.mxu0 %v324
    %v373 = vpop.f32.mrf.mxu0
    %v374 = vadd.f32 %v351, %v373
    %375 = vdwg.mxu0
    %376 = vmatpush.msra.mxu0 %v286
    %377 = vmatpush.msra.mxu0 %v284
    %378 = vmatpush.msra.mxu0 %v282
    %379 = vmatpush.msra.mxu0 %v280
    %380 = vmatpush.msra.mxu0 %v278
    %381 = vmatpush.msra.mxu0 %v276
    %382 = vmatpush.msra.mxu0 %v274
    %383 = vmatpush.msra.mxu0 %v272
    %384 = vmatpush.msra.mxu0 %v270
    %385 = vmatpush.msra.mxu0 %v268
    %386 = vmatpush.msra.mxu0 %v266
    %387 = vmatpush.msra.mxu0 %v264
    %388 = vmatpush.msra.mxu0 %v262
    %389 = vmatpush.msra.mxu0 %v260
    %390 = vmatpush.msra.mxu0 %v258
    %391 = vmatpush.msra.mxu0 %v256
    %392 = vmatmul.f32.gmra.mxu0 %v321
    %v393 = vpop.f32.mrf.mxu0
    %v394 = vadd.f32 %v327, %v393
    %395 = vmatmul.f32.gmra.mxu0 %v323
    %v396 = vpop.f32.mrf.mxu0
    %v397 = vadd.f32 %v327, %v396
    %398 = vdwg.mxu0
    %399 = vmatpush.msra.mxu0 %v318
    %400 = vmatpush.msra.mxu0 %v316
    %401 = vmatpush.msra.mxu0 %v314
    %402 = vmatpush.msra.mxu0 %v312
    %403 = vmatpush.msra.mxu0 %v310
    %404 = vmatpush.msra.mxu0 %v308
    %405 = vmatpush.msra.mxu0 %v306
    %406 = vmatpush.msra.mxu0 %v304
    %407 = vmatpush.msra.mxu0 %v302
    %408 = vmatpush.msra.mxu0 %v300
    %409 = vmatpush.msra.mxu0 %v298
    %410 = vmatpush.msra.mxu0 %v296
    %411 = vmatpush.msra.mxu0 %v294
    %412 = vmatpush.msra.mxu0 %v292
    %413 = vmatpush.msra.mxu0 %v290
    %414 = vmatpush.msra.mxu0 %v288
    %415 = vmatmul.f32.gmra.mxu0 %v322
    %v416 = vpop.f32.mrf.mxu0
    %v417 = vadd.f32 %v394, %v416
    %418 = vmatmul.f32.gmra.mxu0 %v324
    %v419 = vpop.f32.mrf.mxu0
    %v420 = vadd.f32 %v397, %v419
    %421 = vdwg.mxu0
    %v422 = vmul.f32 %v371, %v371
    %v423 = vmul.f32 %v374, %v374
    %v424 = vmul.f32 %v417, %v417
    %v425 = vmul.f32 %v420, %v420
    %v426 = vadd.f32 %v422, %v424
    %v427 = vadd.f32 %v423, %v425
    %v428 = vadd.f32 %v426, 1e-12
    %v429 = vadd.f32 %v427, 1e-12
    %v430 = vrsqrt.pop %v428
    %v431 = vmul.f32 %v430, %v428
    %v432 = vmul.f32 %v431, %v430
    %v433 = vmul.f32 0.5, %v432
    %v434 = vsub.f32 1.5, %v433
    %v435 = vmul.f32 %v430, %v434
    %vm436 = vweird.f32 %v428
    %vm437 = vweird.f32 %v430
    %vm438 = vmor %vm436, %vm437
    %v439 = vsel %vm438, %v430, %v435
    %v440 = vrsqrt.pop %v429
    %v441 = vmul.f32 %v440, %v429
    %v442 = vmul.f32 %v441, %v440
    %v443 = vmul.f32 0.5, %v442
    %v444 = vsub.f32 1.5, %v443
    %v445 = vmul.f32 %v440, %v444
    %vm446 = vweird.f32 %v429
    %vm447 = vweird.f32 %v440
    %vm448 = vmor %vm446, %vm447
    %v449 = vsel %vm448, %v440, %v445
    %v450 = vmul.f32 %v426, %v439
    %v451 = vmul.f32 %v427, %v449
    %v453 = vperm.slane %v320, 0
    %v455 = vadd.f32 %v450, %v453
    %v456 = vadd.f32 %v451, %v453
    %vm457 = vcmp.gt.f32.partialorder %v455, 0.0
    %vm458 = vcmp.gt.f32.partialorder %v456, 0.0
    %v459 = vmul.f32 %v453, %v439
    %v460 = vmul.f32 %v453, %v449
    %v461 = vadd.f32 %v459, 1.0
    %v462 = vadd.f32 %v460, 1.0
    %v463 = vsel %vm457, %v461, 0.0
    %v464 = vsel %vm458, %v462, 0.0
    %v465 = vmul.f32 %v371, %v463
    %v466 = vmul.f32 %v374, %v464
    %467 = vst [vmem:[#allocation2] sm:$0xff] %v465
    %468 = vst [vmem:[#allocation2 + $0x10] sm:$0xff] %v466
    %v469 = vmul.f32 %v417, %v463
    %v470 = vmul.f32 %v420, %v464
    %471 = vst [vmem:[#allocation2 + $0x8] sm:$0xff] %v469
    %472 = vst [vmem:[#allocation2 + $0x18] sm:$0xff] %v470
    %v473 = vld [vmem:[#allocation11] sm:$0xff]
    %v474 = vld [vmem:[#allocation11 + $0x8] sm:$0xff]
    %v475 = vld [vmem:[#allocation11 + $0x10] sm:$0xff]
    %v476 = vld [vmem:[#allocation11 + $0x18] sm:$0xff]
    %v477 = vld [vmem:[#allocation11 + $0x20] sm:$0xff]
    %v478 = vld [vmem:[#allocation11 + $0x28] sm:$0xff]
    %v479 = vld [vmem:[#allocation11 + $0x30] sm:$0xff]
    %v480 = vld [vmem:[#allocation11 + $0x38] sm:$0xff]
    %v481 = vld [vmem:[#allocation11 + $0x40] sm:$0xff]
    %v482 = vld [vmem:[#allocation11 + $0x48] sm:$0xff]
    %v483 = vld [vmem:[#allocation11 + $0x50] sm:$0xff]
    %v484 = vld [vmem:[#allocation11 + $0x58] sm:$0xff]
    %v485 = vld [vmem:[#allocation11 + $0x60] sm:$0xff]
    %v486 = vld [vmem:[#allocation11 + $0x68] sm:$0xff]
    %v487 = vld [vmem:[#allocation11 + $0x70] sm:$0xff]
    %v488 = vld [vmem:[#allocation11 + $0x78] sm:$0xff]
    %v489 = vld [vmem:[#allocation11 + $0x80] sm:$0xff]
    %v490 = vld [vmem:[#allocation11 + $0x88] sm:$0xff]
    %v491 = vld [vmem:[#allocation11 + $0x90] sm:$0xff]
    %v492 = vld [vmem:[#allocation11 + $0x98] sm:$0xff]
    %v493 = vld [vmem:[#allocation11 + $0xa0] sm:$0xff]
    %v494 = vld [vmem:[#allocation11 + $0xa8] sm:$0xff]
    %v495 = vld [vmem:[#allocation11 + $0xb0] sm:$0xff]
    %v496 = vld [vmem:[#allocation11 + $0xb8] sm:$0xff]
    %v497 = vld [vmem:[#allocation11 + $0xc0] sm:$0xff]
    %v498 = vld [vmem:[#allocation11 + $0xc8] sm:$0xff]
    %v499 = vld [vmem:[#allocation11 + $0xd0] sm:$0xff]
    %v500 = vld [vmem:[#allocation11 + $0xd8] sm:$0xff]
    %v501 = vld [vmem:[#allocation11 + $0xe0] sm:$0xff]
    %v502 = vld [vmem:[#allocation11 + $0xe8] sm:$0xff]
    %v503 = vld [vmem:[#allocation11 + $0xf0] sm:$0xff]
    %v504 = vld [vmem:[#allocation11 + $0xf8] sm:$0xff]
    %v505 = vld [vmem:[#allocation11 + $0x100] sm:$0xff]
    %v506 = vld [vmem:[#allocation11 + $0x108] sm:$0xff]
    %v507 = vld [vmem:[#allocation11 + $0x110] sm:$0xff]
    %v508 = vld [vmem:[#allocation11 + $0x118] sm:$0xff]
    %v509 = vld [vmem:[#allocation11 + $0x120] sm:$0xff]
    %v510 = vld [vmem:[#allocation11 + $0x128] sm:$0xff]
    %v511 = vld [vmem:[#allocation11 + $0x130] sm:$0xff]
    %v512 = vld [vmem:[#allocation11 + $0x138] sm:$0xff]
    %v513 = vld [vmem:[#allocation11 + $0x140] sm:$0xff]
    %v514 = vld [vmem:[#allocation11 + $0x148] sm:$0xff]
    %v515 = vld [vmem:[#allocation11 + $0x150] sm:$0xff]
    %v516 = vld [vmem:[#allocation11 + $0x158] sm:$0xff]
    %v517 = vld [vmem:[#allocation11 + $0x160] sm:$0xff]
    %v518 = vld [vmem:[#allocation11 + $0x168] sm:$0xff]
    %v519 = vld [vmem:[#allocation11 + $0x170] sm:$0xff]
    %v520 = vld [vmem:[#allocation11 + $0x178] sm:$0xff]
    %v521 = vld [vmem:[#allocation11 + $0x180] sm:$0xff]
    %v522 = vld [vmem:[#allocation11 + $0x188] sm:$0xff]
    %v523 = vld [vmem:[#allocation11 + $0x190] sm:$0xff]
    %v524 = vld [vmem:[#allocation11 + $0x198] sm:$0xff]
    %v525 = vld [vmem:[#allocation11 + $0x1a0] sm:$0xff]
    %v526 = vld [vmem:[#allocation11 + $0x1a8] sm:$0xff]
    %v527 = vld [vmem:[#allocation11 + $0x1b0] sm:$0xff]
    %v528 = vld [vmem:[#allocation11 + $0x1b8] sm:$0xff]
    %v529 = vld [vmem:[#allocation11 + $0x1c0] sm:$0xff]
    %v530 = vld [vmem:[#allocation11 + $0x1c8] sm:$0xff]
    %v531 = vld [vmem:[#allocation11 + $0x1d0] sm:$0xff]
    %v532 = vld [vmem:[#allocation11 + $0x1d8] sm:$0xff]
    %v533 = vld [vmem:[#allocation11 + $0x1e0] sm:$0xff]
    %v534 = vld [vmem:[#allocation11 + $0x1e8] sm:$0xff]
    %v535 = vld [vmem:[#allocation11 + $0x1f0] sm:$0xff]
    %v536 = vld [vmem:[#allocation11 + $0x1f8] sm:$0xff]
    %v537 = vld [vmem:[%s6] sm:$0x3]
    %v538 = vld [vmem:[#allocation12] sm:$0x1]
    %v539 = vld [vmem:[#allocation2] sm:$0xff]
    %v540 = vld [vmem:[#allocation2 + $0x8] sm:$0xff]
    %v541 = vld [vmem:[#allocation2 + $0x10] sm:$0xff]
    %v542 = vld [vmem:[#allocation2 + $0x18] sm:$0xff]
    %v544 = vperm.slane %v537, 0
    %v545 = vperm.slane %v537, 1
    %548 = vmatpush.msra.mxu0 %v503
    %549 = vmatpush.msra.mxu0 %v501
    %550 = vmatpush.msra.mxu0 %v499
    %551 = vmatpush.msra.mxu0 %v497
    %552 = vmatpush.msra.mxu0 %v495
    %553 = vmatpush.msra.mxu0 %v493
    %554 = vmatpush.msra.mxu0 %v491
    %555 = vmatpush.msra.mxu0 %v489
    %556 = vmatpush.msra.mxu0 %v487
    %557 = vmatpush.msra.mxu0 %v485
    %558 = vmatpush.msra.mxu0 %v483
    %559 = vmatpush.msra.mxu0 %v481
    %560 = vmatpush.msra.mxu0 %v479
    %561 = vmatpush.msra.mxu0 %v477
    %562 = vmatpush.msra.mxu0 %v475
    %563 = vmatpush.msra.mxu0 %v473
    %564 = vmatmul.f32.gmra.mxu0 %v539
    %v565 = vpop.f32.mrf.mxu0
    %v566 = vadd.f32 %v544, %v565
    %567 = vmatmul.f32.gmra.mxu0 %v541
    %v568 = vpop.f32.mrf.mxu0
    %v569 = vadd.f32 %v544, %v568
    %570 = vdwg.mxu0
    %571 = vmatpush.msra.mxu0 %v535
    %572 = vmatpush.msra.mxu0 %v533
    %573 = vmatpush.msra.mxu0 %v531
    %574 = vmatpush.msra.mxu0 %v529
    %575 = vmatpush.msra.mxu0 %v527
    %576 = vmatpush.msra.mxu0 %v525
    %577 = vmatpush.msra.mxu0 %v523
    %578 = vmatpush.msra.mxu0 %v521
    %579 = vmatpush.msra.mxu0 %v519
    %580 = vmatpush.msra.mxu0 %v517
    %581 = vmatpush.msra.mxu0 %v515
    %582 = vmatpush.msra.mxu0 %v513
    %583 = vmatpush.msra.mxu0 %v511
    %584 = vmatpush.msra.mxu0 %v509
    %585 = vmatpush.msra.mxu0 %v507
    %586 = vmatpush.msra.mxu0 %v505
    %587 = vmatmul.f32.gmra.mxu0 %v540
    %v588 = vpop.f32.mrf.mxu0
    %v589 = vadd.f32 %v566, %v588
    %590 = vmatmul.f32.gmra.mxu0 %v542
    %v591 = vpop.f32.mrf.mxu0
    %v592 = vadd.f32 %v569, %v591
    %593 = vdwg.mxu0
    %594 = vmatpush.msra.mxu0 %v504
    %595 = vmatpush.msra.mxu0 %v502
    %596 = vmatpush.msra.mxu0 %v500
    %597 = vmatpush.msra.mxu0 %v498
    %598 = vmatpush.msra.mxu0 %v496
    %599 = vmatpush.msra.mxu0 %v494
    %600 = vmatpush.msra.mxu0 %v492
    %601 = vmatpush.msra.mxu0 %v490
    %602 = vmatpush.msra.mxu0 %v488
    %603 = vmatpush.msra.mxu0 %v486
    %604 = vmatpush.msra.mxu0 %v484
    %605 = vmatpush.msra.mxu0 %v482
    %606 = vmatpush.msra.mxu0 %v480
    %607 = vmatpush.msra.mxu0 %v478
    %608 = vmatpush.msra.mxu0 %v476
    %609 = vmatpush.msra.mxu0 %v474
    %610 = vmatmul.f32.gmra.mxu0 %v539
    %v611 = vpop.f32.mrf.mxu0
    %v612 = vadd.f32 %v545, %v611
    %613 = vmatmul.f32.gmra.mxu0 %v541
    %v614 = vpop.f32.mrf.mxu0
    %v615 = vadd.f32 %v545, %v614
    %616 = vdwg.mxu0
    %617 = vmatpush.msra.mxu0 %v536
    %618 = vmatpush.msra.mxu0 %v534
    %619 = vmatpush.msra.mxu0 %v532
    %620 = vmatpush.msra.mxu0 %v530
    %621 = vmatpush.msra.mxu0 %v528
    %622 = vmatpush.msra.mxu0 %v526
    %623 = vmatpush.msra.mxu0 %v524
    %624 = vmatpush.msra.mxu0 %v522
    %625 = vmatpush.msra.mxu0 %v520
    %626 = vmatpush.msra.mxu0 %v518
    %627 = vmatpush.msra.mxu0 %v516
    %628 = vmatpush.msra.mxu0 %v514
    %629 = vmatpush.msra.mxu0 %v512
    %630 = vmatpush.msra.mxu0 %v510
    %631 = vmatpush.msra.mxu0 %v508
    %632 = vmatpush.msra.mxu0 %v506
    %633 = vmatmul.f32.gmra.mxu0 %v540
    %v634 = vpop.f32.mrf.mxu0
    %v635 = vadd.f32 %v612, %v634
    %636 = vmatmul.f32.gmra.mxu0 %v542
    %v637 = vpop.f32.mrf.mxu0
    %v638 = vadd.f32 %v615, %v637
    %639 = vdwg.mxu0
    %v640 = vmul.f32 %v589, %v589
    %v641 = vmul.f32 %v592, %v592
    %v642 = vmul.f32 %v635, %v635
    %v643 = vmul.f32 %v638, %v638
    %v644 = vadd.f32 %v640, %v642
    %v645 = vadd.f32 %v641, %v643
    %v646 = vadd.f32 %v644, 1e-12
    %v647 = vadd.f32 %v645, 1e-12
    %v648 = vrsqrt.pop %v646
    %v649 = vmul.f32 %v648, %v646
    %v650 = vmul.f32 %v649, %v648
    %v651 = vmul.f32 0.5, %v650
    %v652 = vsub.f32 1.5, %v651
    %v653 = vmul.f32 %v648, %v652
    %vm654 = vweird.f32 %v646
    %vm655 = vweird.f32 %v648
    %vm656 = vmor %vm654, %vm655
    %v657 = vsel %vm656, %v648, %v653
    %v658 = vrsqrt.pop %v647
    %v659 = vmul.f32 %v658, %v647
    %v660 = vmul.f32 %v659, %v658
    %v661 = vmul.f32 0.5, %v660
    %v662 = vsub.f32 1.5, %v661
    %v663 = vmul.f32 %v658, %v662
    %vm664 = vweird.f32 %v647
    %vm665 = vweird.f32 %v658
    %vm666 = vmor %vm664, %vm665
    %v667 = vsel %vm666, %v658, %v663
    %v668 = vmul.f32 %v644, %v657
    %v669 = vmul.f32 %v645, %v667
    %v671 = vperm.slane %v538, 0
    %v673 = vadd.f32 %v668, %v671
    %v674 = vadd.f32 %v669, %v671
    %vm675 = vcmp.gt.f32.partialorder %v673, 0.0
    %vm676 = vcmp.gt.f32.partialorder %v674, 0.0
    %v677 = vmul.f32 %v671, %v657
    %v678 = vmul.f32 %v671, %v667
    %v679 = vadd.f32 %v677, 1.0
    %v680 = vadd.f32 %v678, 1.0
    %v681 = vsel %vm675, %v679, 0.0
    %v682 = vsel %vm676, %v680, 0.0
    %v683 = vmul.f32 %v589, %v681
    %v684 = vmul.f32 %v592, %v682
    %685 = vst [vmem:[#allocation2] sm:$0xff] %v683
    %686 = vst [vmem:[#allocation2 + $0x10] sm:$0xff] %v684
    %v687 = vmul.f32 %v635, %v681
    %v688 = vmul.f32 %v638, %v682
    %689 = vst [vmem:[#allocation2 + $0x8] sm:$0xff] %v687
    %690 = vst [vmem:[#allocation2 + $0x18] sm:$0xff] %v688
    %v691 = vld [vmem:[#allocation14] sm:$0xff]
    %v692 = vld [vmem:[#allocation14 + $0x8] sm:$0xff]
    %v693 = vld [vmem:[#allocation14 + $0x10] sm:$0xff]
    %v694 = vld [vmem:[#allocation14 + $0x18] sm:$0xff]
    %v695 = vld [vmem:[#allocation14 + $0x20] sm:$0xff]
    %v696 = vld [vmem:[#allocation14 + $0x28] sm:$0xff]
    %v697 = vld [vmem:[#allocation14 + $0x30] sm:$0xff]
    %v698 = vld [vmem:[#allocation14 + $0x38] sm:$0xff]
    %v699 = vld [vmem:[#allocation14 + $0x40] sm:$0xff]
    %v700 = vld [vmem:[#allocation14 + $0x48] sm:$0xff]
    %v701 = vld [vmem:[#allocation14 + $0x50] sm:$0xff]
    %v702 = vld [vmem:[#allocation14 + $0x58] sm:$0xff]
    %v703 = vld [vmem:[#allocation14 + $0x60] sm:$0xff]
    %v704 = vld [vmem:[#allocation14 + $0x68] sm:$0xff]
    %v705 = vld [vmem:[#allocation14 + $0x70] sm:$0xff]
    %v706 = vld [vmem:[#allocation14 + $0x78] sm:$0xff]
    %v707 = vld [vmem:[#allocation14 + $0x80] sm:$0xff]
    %v708 = vld [vmem:[#allocation14 + $0x88] sm:$0xff]
    %v709 = vld [vmem:[#allocation14 + $0x90] sm:$0xff]
    %v710 = vld [vmem:[#allocation14 + $0x98] sm:$0xff]
    %v711 = vld [vmem:[#allocation14 + $0xa0] sm:$0xff]
    %v712 = vld [vmem:[#allocation14 + $0xa8] sm:$0xff]
    %v713 = vld [vmem:[#allocation14 + $0xb0] sm:$0xff]
    %v714 = vld [vmem:[#allocation14 + $0xb8] sm:$0xff]
    %v715 = vld [vmem:[#allocation14 + $0xc0] sm:$0xff]
    %v716 = vld [vmem:[#allocation14 + $0xc8] sm:$0xff]
    %v717 = vld [vmem:[#allocation14 + $0xd0] sm:$0xff]
    %v718 = vld [vmem:[#allocation14 + $0xd8] sm:$0xff]
    %v719 = vld [vmem:[#allocation14 + $0xe0] sm:$0xff]
    %v720 = vld [vmem:[#allocation14 + $0xe8] sm:$0xff]
    %v721 = vld [vmem:[#allocation14 + $0xf0] sm:$0xff]
    %v722 = vld [vmem:[#allocation14 + $0xf8] sm:$0xff]
    %v723 = vld [vmem:[#allocation14 + $0x100] sm:$0xff]
    %v724 = vld [vmem:[#allocation14 + $0x108] sm:$0xff]
    %v725 = vld [vmem:[#allocation14 + $0x110] sm:$0xff]
    %v726 = vld [vmem:[#allocation14 + $0x118] sm:$0xff]
    %v727 = vld [vmem:[#allocation14 + $0x120] sm:$0xff]
    %v728 = vld [vmem:[#allocation14 + $0x128] sm:$0xff]
    %v729 = vld [vmem:[#allocation14 + $0x130] sm:$0xff]
    %v730 = vld [vmem:[#allocation14 + $0x138] sm:$0xff]
    %v731 = vld [vmem:[#allocation14 + $0x140] sm:$0xff]
    %v732 = vld [vmem:[#allocation14 + $0x148] sm:$0xff]
    %v733 = vld [vmem:[#allocation14 + $0x150] sm:$0xff]
    %v734 = vld [vmem:[#allocation14 + $0x158] sm:$0xff]
    %v735 = vld [vmem:[#allocation14 + $0x160] sm:$0xff]
    %v736 = vld [vmem:[#allocation14 + $0x168] sm:$0xff]
    %v737 = vld [vmem:[#allocation14 + $0x170] sm:$0xff]
    %v738 = vld [vmem:[#allocation14 + $0x178] sm:$0xff]
    %v739 = vld [vmem:[#allocation14 + $0x180] sm:$0xff]
    %v740 = vld [vmem:[#allocation14 + $0x188] sm:$0xff]
    %v741 = vld [vmem:[#allocation14 + $0x190] sm:$0xff]
    %v742 = vld [vmem:[#allocation14 + $0x198] sm:$0xff]
    %v743 = vld [vmem:[#allocation14 + $0x1a0] sm:$0xff]
    %v744 = vld [vmem:[#allocation14 + $0x1a8] sm:$0xff]
    %v745 = vld [vmem:[#allocation14 + $0x1b0] sm:$0xff]
    %v746 = vld [vmem:[#allocation14 + $0x1b8] sm:$0xff]
    %v747 = vld [vmem:[#allocation14 + $0x1c0] sm:$0xff]
    %v748 = vld [vmem:[#allocation14 + $0x1c8] sm:$0xff]
    %v749 = vld [vmem:[#allocation14 + $0x1d0] sm:$0xff]
    %v750 = vld [vmem:[#allocation14 + $0x1d8] sm:$0xff]
    %v751 = vld [vmem:[#allocation14 + $0x1e0] sm:$0xff]
    %v752 = vld [vmem:[#allocation14 + $0x1e8] sm:$0xff]
    %v753 = vld [vmem:[#allocation14 + $0x1f0] sm:$0xff]
    %v754 = vld [vmem:[#allocation14 + $0x1f8] sm:$0xff]
    %v755 = vld [vmem:[%s9] sm:$0x3]
    %v756 = vld [vmem:[#allocation15] sm:$0x1]
    %v757 = vld [vmem:[#allocation2] sm:$0xff]
    %v758 = vld [vmem:[#allocation2 + $0x8] sm:$0xff]
    %v759 = vld [vmem:[#allocation2 + $0x10] sm:$0xff]
    %v760 = vld [vmem:[#allocation2 + $0x18] sm:$0xff]
    %v762 = vperm.slane %v755, 0
    %v763 = vperm.slane %v755, 1
    %766 = vmatpush.msra.mxu0 %v721
    %767 = vmatpush.msra.mxu0 %v719
    %768 = vmatpush.msra.mxu0 %v717
    %769 = vmatpush.msra.mxu0 %v715
    %770 = vmatpush.msra.mxu0 %v713
    %771 = vmatpush.msra.mxu0 %v711
    %772 = vmatpush.msra.mxu0 %v709
    %773 = vmatpush.msra.mxu0 %v707
    %774 = vmatpush.msra.mxu0 %v705
    %775 = vmatpush.msra.mxu0 %v703
    %776 = vmatpush.msra.mxu0 %v701
    %777 = vmatpush.msra.mxu0 %v699
    %778 = vmatpush.msra.mxu0 %v697
    %779 = vmatpush.msra.mxu0 %v695
    %780 = vmatpush.msra.mxu0 %v693
    %781 = vmatpush.msra.mxu0 %v691
    %782 = vmatmul.f32.gmra.mxu0 %v757
    %v783 = vpop.f32.mrf.mxu0
    %v784 = vadd.f32 %v762, %v783
    %785 = vmatmul.f32.gmra.mxu0 %v759
    %v786 = vpop.f32.mrf.mxu0
    %v787 = vadd.f32 %v762, %v786
    %788 = vdwg.mxu0
    %789 = vmatpush.msra.mxu0 %v753
    %790 = vmatpush.msra.mxu0 %v751
    %791 = vmatpush.msra.mxu0 %v749
    %792 = vmatpush.msra.mxu0 %v747
    %793 = vmatpush.msra.mxu0 %v745
    %794 = vmatpush.msra.mxu0 %v743
    %795 = vmatpush.msra.mxu0 %v741
    %796 = vmatpush.msra.mxu0 %v739
    %797 = vmatpush.msra.mxu0 %v737
    %798 = vmatpush.msra.mxu0 %v735
    %799 = vmatpush.msra.mxu0 %v733
    %800 = vmatpush.msra.mxu0 %v731
    %801 = vmatpush.msra.mxu0 %v729
    %802 = vmatpush.msra.mxu0 %v727
    %803 = vmatpush.msra.mxu0 %v725
    %804 = vmatpush.msra.mxu0 %v723
    %805 = vmatmul.f32.gmra.mxu0 %v758
    %v806 = vpop.f32.mrf.mxu0
    %v807 = vadd.f32 %v784, %v806
    %808 = vmatmul.f32.gmra.mxu0 %v760
    %v809 = vpop.f32.mrf.mxu0
    %v810 = vadd.f32 %v787, %v809
    %811 = vdwg.mxu0
    %812 = vmatpush.msra.mxu0 %v722
    %813 = vmatpush.msra.mxu0 %v720
    %814 = vmatpush.msra.mxu0 %v718
    %815 = vmatpush.msra.mxu0 %v716
    %816 = vmatpush.msra.mxu0 %v714
    %817 = vmatpush.msra.mxu0 %v712
    %818 = vmatpush.msra.mxu0 %v710
    %819 = vmatpush.msra.mxu0 %v708
    %820 = vmatpush.msra.mxu0 %v706
    %821 = vmatpush.msra.mxu0 %v704
    %822 = vmatpush.msra.mxu0 %v702
    %823 = vmatpush.msra.mxu0 %v700
    %824 = vmatpush.msra.mxu0 %v698
    %825 = vmatpush.msra.mxu0 %v696
    %826 = vmatpush.msra.mxu0 %v694
    %827 = vmatpush.msra.mxu0 %v692
    %828 = vmatmul.f32.gmra.mxu0 %v757
    %v829 = vpop.f32.mrf.mxu0
    %v830 = vadd.f32 %v763, %v829
    %831 = vmatmul.f32.gmra.mxu0 %v759
    %v832 = vpop.f32.mrf.mxu0
    %v833 = vadd.f32 %v763, %v832
    %834 = vdwg.mxu0
    %835 = vmatpush.msra.mxu0 %v754
    %836 = vmatpush.msra.mxu0 %v752
    %837 = vmatpush.msra.mxu0 %v750
    %838 = vmatpush.msra.mxu0 %v748
    %839 = vmatpush.msra.mxu0 %v746
    %840 = vmatpush.msra.mxu0 %v744
    %841 = vmatpush.msra.mxu0 %v742
    %842 = vmatpush.msra.mxu0 %v740
    %843 = vmatpush.msra.mxu0 %v738
    %844 = vmatpush.msra.mxu0 %v736
    %845 = vmatpush.msra.mxu0 %v734
    %846 = vmatpush.msra.mxu0 %v732
    %847 = vmatpush.msra.mxu0 %v730
    %848 = vmatpush.msra.mxu0 %v728
    %849 = vmatpush.msra.mxu0 %v726
    %850 = vmatpush.msra.mxu0 %v724
    %851 = vmatmul.f32.gmra.mxu0 %v758
    %v852 = vpop.f32.mrf.mxu0
    %v853 = vadd.f32 %v830, %v852
    %854 = vmatmul.f32.gmra.mxu0 %v760
    %v855 = vpop.f32.mrf.mxu0
    %v856 = vadd.f32 %v833, %v855
    %857 = vdwg.mxu0
    %v858 = vmul.f32 %v807, %v807
    %v859 = vmul.f32 %v810, %v810
    %v860 = vmul.f32 %v853, %v853
    %v861 = vmul.f32 %v856, %v856
    %v862 = vadd.f32 %v858, %v860
    %v863 = vadd.f32 %v859, %v861
    %v864 = vadd.f32 %v862, 1e-12
    %v865 = vadd.f32 %v863, 1e-12
    %v866 = vrsqrt.pop %v864
    %v867 = vmul.f32 %v866, %v864
    %v868 = vmul.f32 %v867, %v866
    %v869 = vmul.f32 0.5, %v868
    %v870 = vsub.f32 1.5, %v869
    %v871 = vmul.f32 %v866, %v870
    %vm872 = vweird.f32 %v864
    %vm873 = vweird.f32 %v866
    %vm874 = vmor %vm872, %vm873
    %v875 = vsel %vm874, %v866, %v871
    %v876 = vrsqrt.pop %v865
    %v877 = vmul.f32 %v876, %v865
    %v878 = vmul.f32 %v877, %v876
    %v879 = vmul.f32 0.5, %v878
    %v880 = vsub.f32 1.5, %v879
    %v881 = vmul.f32 %v876, %v880
    %vm882 = vweird.f32 %v865
    %vm883 = vweird.f32 %v876
    %vm884 = vmor %vm882, %vm883
    %v885 = vsel %vm884, %v876, %v881
    %v886 = vmul.f32 %v862, %v875
    %v887 = vmul.f32 %v863, %v885
    %v889 = vperm.slane %v756, 0
    %v891 = vadd.f32 %v886, %v889
    %v892 = vadd.f32 %v887, %v889
    %vm893 = vcmp.gt.f32.partialorder %v891, 0.0
    %vm894 = vcmp.gt.f32.partialorder %v892, 0.0
    %v895 = vmul.f32 %v889, %v875
    %v896 = vmul.f32 %v889, %v885
    %v897 = vadd.f32 %v895, 1.0
    %v898 = vadd.f32 %v896, 1.0
    %v899 = vsel %vm893, %v897, 0.0
    %v900 = vsel %vm894, %v898, 0.0
    %v901 = vmul.f32 %v807, %v899
    %v902 = vmul.f32 %v810, %v900
    %903 = vst [vmem:[#allocation2] sm:$0xff] %v901
    %904 = vst [vmem:[#allocation2 + $0x10] sm:$0xff] %v902
    %v905 = vmul.f32 %v853, %v899
    %v906 = vmul.f32 %v856, %v900
    %907 = vst [vmem:[#allocation2 + $0x8] sm:$0xff] %v905
    %908 = vst [vmem:[#allocation2 + $0x18] sm:$0xff] %v906
    %v909 = vld [vmem:[#allocation17] sm:$0xff]
    %v910 = vld [vmem:[#allocation17 + $0x8] sm:$0xff]
    %v911 = vld [vmem:[#allocation17 + $0x10] sm:$0xff]
    %v912 = vld [vmem:[#allocation17 + $0x18] sm:$0xff]
    %v913 = vld [vmem:[#allocation17 + $0x20] sm:$0xff]
    %v914 = vld [vmem:[#allocation17 + $0x28] sm:$0xff]
    %v915 = vld [vmem:[#allocation17 + $0x30] sm:$0xff]
    %v916 = vld [vmem:[#allocation17 + $0x38] sm:$0xff]
    %v917 = vld [vmem:[#allocation17 + $0x40] sm:$0xff]
    %v918 = vld [vmem:[#allocation17 + $0x48] sm:$0xff]
    %v919 = vld [vmem:[#allocation17 + $0x50] sm:$0xff]
    %v920 = vld [vmem:[#allocation17 + $0x58] sm:$0xff]
    %v921 = vld [vmem:[#allocation17 + $0x60] sm:$0xff]
    %v922 = vld [vmem:[#allocation17 + $0x68] sm:$0xff]
    %v923 = vld [vmem:[#allocation17 + $0x70] sm:$0xff]
    %v924 = vld [vmem:[#allocation17 + $0x78] sm:$0xff]
    %v925 = vld [vmem:[#allocation17 + $0x80] sm:$0xff]
    %v926 = vld [vmem:[#allocation17 + $0x88] sm:$0xff]
    %v927 = vld [vmem:[#allocation17 + $0x90] sm:$0xff]
    %v928 = vld [vmem:[#allocation17 + $0x98] sm:$0xff]
    %v929 = vld [vmem:[#allocation17 + $0xa0] sm:$0xff]
    %v930 = vld [vmem:[#allocation17 + $0xa8] sm:$0xff]
    %v931 = vld [vmem:[#allocation17 + $0xb0] sm:$0xff]
    %v932 = vld [vmem:[#allocation17 + $0xb8] sm:$0xff]
    %v933 = vld [vmem:[#allocation17 + $0xc0] sm:$0xff]
    %v934 = vld [vmem:[#allocation17 + $0xc8] sm:$0xff]
    %v935 = vld [vmem:[#allocation17 + $0xd0] sm:$0xff]
    %v936 = vld [vmem:[#allocation17 + $0xd8] sm:$0xff]
    %v937 = vld [vmem:[#allocation17 + $0xe0] sm:$0xff]
    %v938 = vld [vmem:[#allocation17 + $0xe8] sm:$0xff]
    %v939 = vld [vmem:[#allocation17 + $0xf0] sm:$0xff]
    %v940 = vld [vmem:[#allocation17 + $0xf8] sm:$0xff]
    %v941 = vld [vmem:[#allocation17 + $0x100] sm:$0xff]
    %v942 = vld [vmem:[#allocation17 + $0x108] sm:$0xff]
    %v943 = vld [vmem:[#allocation17 + $0x110] sm:$0xff]
    %v944 = vld [vmem:[#allocation17 + $0x118] sm:$0xff]
    %v945 = vld [vmem:[#allocation17 + $0x120] sm:$0xff]
    %v946 = vld [vmem:[#allocation17 + $0x128] sm:$0xff]
    %v947 = vld [vmem:[#allocation17 + $0x130] sm:$0xff]
    %v948 = vld [vmem:[#allocation17 + $0x138] sm:$0xff]
    %v949 = vld [vmem:[#allocation17 + $0x140] sm:$0xff]
    %v950 = vld [vmem:[#allocation17 + $0x148] sm:$0xff]
    %v951 = vld [vmem:[#allocation17 + $0x150] sm:$0xff]
    %v952 = vld [vmem:[#allocation17 + $0x158] sm:$0xff]
    %v953 = vld [vmem:[#allocation17 + $0x160] sm:$0xff]
    %v954 = vld [vmem:[#allocation17 + $0x168] sm:$0xff]
    %v955 = vld [vmem:[#allocation17 + $0x170] sm:$0xff]
    %v956 = vld [vmem:[#allocation17 + $0x178] sm:$0xff]
    %v957 = vld [vmem:[#allocation17 + $0x180] sm:$0xff]
    %v958 = vld [vmem:[#allocation17 + $0x188] sm:$0xff]
    %v959 = vld [vmem:[#allocation17 + $0x190] sm:$0xff]
    %v960 = vld [vmem:[#allocation17 + $0x198] sm:$0xff]
    %v961 = vld [vmem:[#allocation17 + $0x1a0] sm:$0xff]
    %v962 = vld [vmem:[#allocation17 + $0x1a8] sm:$0xff]
    %v963 = vld [vmem:[#allocation17 + $0x1b0] sm:$0xff]
    %v964 = vld [vmem:[#allocation17 + $0x1b8] sm:$0xff]
    %v965 = vld [vmem:[#allocation17 + $0x1c0] sm:$0xff]
    %v966 = vld [vmem:[#allocation17 + $0x1c8] sm:$0xff]
    %v967 = vld [vmem:[#allocation17 + $0x1d0] sm:$0xff]
    %v968 = vld [vmem:[#allocation17 + $0x1d8] sm:$0xff]
    %v969 = vld [vmem:[#allocation17 + $0x1e0] sm:$0xff]
    %v970 = vld [vmem:[#allocation17 + $0x1e8] sm:$0xff]
    %v971 = vld [vmem:[#allocation17 + $0x1f0] sm:$0xff]
    %v972 = vld [vmem:[#allocation17 + $0x1f8] sm:$0xff]
    %v973 = vld [vmem:[%s12] sm:$0x3]
    %v974 = vld [vmem:[#allocation18] sm:$0x1]
    %v975 = vld [vmem:[#allocation2] sm:$0xff]
    %v976 = vld [vmem:[#allocation2 + $0x8] sm:$0xff]
    %v977 = vld [vmem:[#allocation2 + $0x10] sm:$0xff]
    %v978 = vld [vmem:[#allocation2 + $0x18] sm:$0xff]
    %v980 = vperm.slane %v973, 0
    %v981 = vperm.slane %v973, 1
    %984 = vmatpush.msra.mxu0 %v939
    %985 = vmatpush.msra.mxu0 %v937
    %986 = vmatpush.msra.mxu0 %v935
    %987 = vmatpush.msra.mxu0 %v933
    %988 = vmatpush.msra.mxu0 %v931
    %989 = vmatpush.msra.mxu0 %v929
    %990 = vmatpush.msra.mxu0 %v927
    %991 = vmatpush.msra.mxu0 %v925
    %992 = vmatpush.msra.mxu0 %v923
    %993 = vmatpush.msra.mxu0 %v921
    %994 = vmatpush.msra.mxu0 %v919
    %995 = vmatpush.msra.mxu0 %v917
    %996 = vmatpush.msra.mxu0 %v915
    %997 = vmatpush.msra.mxu0 %v913
    %998 = vmatpush.msra.mxu0 %v911
    %999 = vmatpush.msra.mxu0 %v909
    %1000 = vmatmul.f32.gmra.mxu0 %v975
    %v1001 = vpop.f32.mrf.mxu0
    %v1002 = vadd.f32 %v980, %v1001
    %1003 = vmatmul.f32.gmra.mxu0 %v977
    %v1004 = vpop.f32.mrf.mxu0
    %v1005 = vadd.f32 %v980, %v1004
    %1006 = vdwg.mxu0
    %1007 = vmatpush.msra.mxu0 %v971
    %1008 = vmatpush.msra.mxu0 %v969
    %1009 = vmatpush.msra.mxu0 %v967
    %1010 = vmatpush.msra.mxu0 %v965
    %1011 = vmatpush.msra.mxu0 %v963
    %1012 = vmatpush.msra.mxu0 %v961
    %1013 = vmatpush.msra.mxu0 %v959
    %1014 = vmatpush.msra.mxu0 %v957
    %1015 = vmatpush.msra.mxu0 %v955
    %1016 = vmatpush.msra.mxu0 %v953
    %1017 = vmatpush.msra.mxu0 %v951
    %1018 = vmatpush.msra.mxu0 %v949
    %1019 = vmatpush.msra.mxu0 %v947
    %1020 = vmatpush.msra.mxu0 %v945
    %1021 = vmatpush.msra.mxu0 %v943
    %1022 = vmatpush.msra.mxu0 %v941
    %1023 = vmatmul.f32.gmra.mxu0 %v976
    %v1024 = vpop.f32.mrf.mxu0
    %v1025 = vadd.f32 %v1002, %v1024
    %1026 = vmatmul.f32.gmra.mxu0 %v978
    %v1027 = vpop.f32.mrf.mxu0
    %v1028 = vadd.f32 %v1005, %v1027
    %1029 = vdwg.mxu0
    %1030 = vmatpush.msra.mxu0 %v940
    %1031 = vmatpush.msra.mxu0 %v938
    %1032 = vmatpush.msra.mxu0 %v936
    %1033 = vmatpush.msra.mxu0 %v934
    %1034 = vmatpush.msra.mxu0 %v932
    %1035 = vmatpush.msra.mxu0 %v930
    %1036 = vmatpush.msra.mxu0 %v928
    %1037 = vmatpush.msra.mxu0 %v926
    %1038 = vmatpush.msra.mxu0 %v924
    %1039 = vmatpush.msra.mxu0 %v922
    %1040 = vmatpush.msra.mxu0 %v920
    %1041 = vmatpush.msra.mxu0 %v918
    %1042 = vmatpush.msra.mxu0 %v916
    %1043 = vmatpush.msra.mxu0 %v914
    %1044 = vmatpush.msra.mxu0 %v912
    %1045 = vmatpush.msra.mxu0 %v910
    %1046 = vmatmul.f32.gmra.mxu0 %v975
    %v1047 = vpop.f32.mrf.mxu0
    %v1048 = vadd.f32 %v981, %v1047
    %1049 = vmatmul.f32.gmra.mxu0 %v977
    %v1050 = vpop.f32.mrf.mxu0
    %v1051 = vadd.f32 %v981, %v1050
    %1052 = vdwg.mxu0
    %1053 = vmatpush.msra.mxu0 %v972
    %1054 = vmatpush.msra.mxu0 %v970
    %1055 = vmatpush.msra.mxu0 %v968
    %1056 = vmatpush.msra.mxu0 %v966
    %1057 = vmatpush.msra.mxu0 %v964
    %1058 = vmatpush.msra.mxu0 %v962
    %1059 = vmatpush.msra.mxu0 %v960
    %1060 = vmatpush.msra.mxu0 %v958
    %1061 = vmatpush.msra.mxu0 %v956
    %1062 = vmatpush.msra.mxu0 %v954
    %1063 = vmatpush.msra.mxu0 %v952
    %1064 = vmatpush.msra.mxu0 %v950
    %1065 = vmatpush.msra.mxu0 %v948
    %1066 = vmatpush.msra.mxu0 %v946
    %1067 = vmatpush.msra.mxu0 %v944
    %1068 = vmatpush.msra.mxu0 %v942
    %1069 = vmatmul.f32.gmra.mxu0 %v976
    %v1070 = vpop.f32.mrf.mxu0
    %v1071 = vadd.f32 %v1048, %v1070
    %1072 = vmatmul.f32.gmra.mxu0 %v978
    %v1073 = vpop.f32.mrf.mxu0
    %v1074 = vadd.f32 %v1051, %v1073
    %1075 = vdwg.mxu0
    %v1076 = vmul.f32 %v1025, %v1025
    %v1077 = vmul.f32 %v1028, %v1028
    %v1078 = vmul.f32 %v1071, %v1071
    %v1079 = vmul.f32 %v1074, %v1074
    %v1080 = vadd.f32 %v1076, %v1078
    %v1081 = vadd.f32 %v1077, %v1079
    %v1082 = vadd.f32 %v1080, 1e-12
    %v1083 = vadd.f32 %v1081, 1e-12
    %v1084 = vrsqrt.pop %v1082
    %v1085 = vmul.f32 %v1084, %v1082
    %v1086 = vmul.f32 %v1085, %v1084
    %v1087 = vmul.f32 0.5, %v1086
    %v1088 = vsub.f32 1.5, %v1087
    %v1089 = vmul.f32 %v1084, %v1088
    %vm1090 = vweird.f32 %v1082
    %vm1091 = vweird.f32 %v1084
    %vm1092 = vmor %vm1090, %vm1091
    %v1093 = vsel %vm1092, %v1084, %v1089
    %v1094 = vrsqrt.pop %v1083
    %v1095 = vmul.f32 %v1094, %v1083
    %v1096 = vmul.f32 %v1095, %v1094
    %v1097 = vmul.f32 0.5, %v1096
    %v1098 = vsub.f32 1.5, %v1097
    %v1099 = vmul.f32 %v1094, %v1098
    %vm1100 = vweird.f32 %v1083
    %vm1101 = vweird.f32 %v1094
    %vm1102 = vmor %vm1100, %vm1101
    %v1103 = vsel %vm1102, %v1094, %v1099
    %v1104 = vmul.f32 %v1080, %v1093
    %v1105 = vmul.f32 %v1081, %v1103
    %v1107 = vperm.slane %v974, 0
    %v1109 = vadd.f32 %v1104, %v1107
    %v1110 = vadd.f32 %v1105, %v1107
    %vm1111 = vcmp.gt.f32.partialorder %v1109, 0.0
    %vm1112 = vcmp.gt.f32.partialorder %v1110, 0.0
    %v1113 = vmul.f32 %v1107, %v1093
    %v1114 = vmul.f32 %v1107, %v1103
    %v1115 = vadd.f32 %v1113, 1.0
    %v1116 = vadd.f32 %v1114, 1.0
    %v1117 = vsel %vm1111, %v1115, 0.0
    %v1118 = vsel %vm1112, %v1116, 0.0
    %v1119 = vmul.f32 %v1025, %v1117
    %v1120 = vmul.f32 %v1028, %v1118
    %1121 = vst [vmem:[#allocation2] sm:$0xff] %v1119
    %1122 = vst [vmem:[#allocation2 + $0x10] sm:$0xff] %v1120
    %v1123 = vmul.f32 %v1071, %v1117
    %v1124 = vmul.f32 %v1074, %v1118
    %1125 = vst [vmem:[#allocation2 + $0x8] sm:$0xff] %v1123
    %1126 = vst [vmem:[#allocation2 + $0x18] sm:$0xff] %v1124
    %v1127 = vld [vmem:[#allocation20] sm:$0xff]
    %v1128 = vld [vmem:[#allocation20 + $0x8] sm:$0xff]
    %v1129 = vld [vmem:[#allocation20 + $0x10] sm:$0xff]
    %v1130 = vld [vmem:[#allocation20 + $0x18] sm:$0xff]
    %v1131 = vld [vmem:[#allocation20 + $0x20] sm:$0xff]
    %v1132 = vld [vmem:[#allocation20 + $0x28] sm:$0xff]
    %v1133 = vld [vmem:[#allocation20 + $0x30] sm:$0xff]
    %v1134 = vld [vmem:[#allocation20 + $0x38] sm:$0xff]
    %v1135 = vld [vmem:[#allocation20 + $0x40] sm:$0xff]
    %v1136 = vld [vmem:[#allocation20 + $0x48] sm:$0xff]
    %v1137 = vld [vmem:[#allocation20 + $0x50] sm:$0xff]
    %v1138 = vld [vmem:[#allocation20 + $0x58] sm:$0xff]
    %v1139 = vld [vmem:[#allocation20 + $0x60] sm:$0xff]
    %v1140 = vld [vmem:[#allocation20 + $0x68] sm:$0xff]
    %v1141 = vld [vmem:[#allocation20 + $0x70] sm:$0xff]
    %v1142 = vld [vmem:[#allocation20 + $0x78] sm:$0xff]
    %v1143 = vld [vmem:[#allocation20 + $0x80] sm:$0xff]
    %v1144 = vld [vmem:[#allocation20 + $0x88] sm:$0xff]
    %v1145 = vld [vmem:[#allocation20 + $0x90] sm:$0xff]
    %v1146 = vld [vmem:[#allocation20 + $0x98] sm:$0xff]
    %v1147 = vld [vmem:[#allocation20 + $0xa0] sm:$0xff]
    %v1148 = vld [vmem:[#allocation20 + $0xa8] sm:$0xff]
    %v1149 = vld [vmem:[#allocation20 + $0xb0] sm:$0xff]
    %v1150 = vld [vmem:[#allocation20 + $0xb8] sm:$0xff]
    %v1151 = vld [vmem:[#allocation20 + $0xc0] sm:$0xff]
    %v1152 = vld [vmem:[#allocation20 + $0xc8] sm:$0xff]
    %v1153 = vld [vmem:[#allocation20 + $0xd0] sm:$0xff]
    %v1154 = vld [vmem:[#allocation20 + $0xd8] sm:$0xff]
    %v1155 = vld [vmem:[#allocation20 + $0xe0] sm:$0xff]
    %v1156 = vld [vmem:[#allocation20 + $0xe8] sm:$0xff]
    %v1157 = vld [vmem:[#allocation20 + $0xf0] sm:$0xff]
    %v1158 = vld [vmem:[#allocation20 + $0xf8] sm:$0xff]
    %v1159 = vld [vmem:[#allocation20 + $0x100] sm:$0xff]
    %v1160 = vld [vmem:[#allocation20 + $0x108] sm:$0xff]
    %v1161 = vld [vmem:[#allocation20 + $0x110] sm:$0xff]
    %v1162 = vld [vmem:[#allocation20 + $0x118] sm:$0xff]
    %v1163 = vld [vmem:[#allocation20 + $0x120] sm:$0xff]
    %v1164 = vld [vmem:[#allocation20 + $0x128] sm:$0xff]
    %v1165 = vld [vmem:[#allocation20 + $0x130] sm:$0xff]
    %v1166 = vld [vmem:[#allocation20 + $0x138] sm:$0xff]
    %v1167 = vld [vmem:[#allocation20 + $0x140] sm:$0xff]
    %v1168 = vld [vmem:[#allocation20 + $0x148] sm:$0xff]
    %v1169 = vld [vmem:[#allocation20 + $0x150] sm:$0xff]
    %v1170 = vld [vmem:[#allocation20 + $0x158] sm:$0xff]
    %v1171 = vld [vmem:[#allocation20 + $0x160] sm:$0xff]
    %v1172 = vld [vmem:[#allocation20 + $0x168] sm:$0xff]
    %v1173 = vld [vmem:[#allocation20 + $0x170] sm:$0xff]
    %v1174 = vld [vmem:[#allocation20 + $0x178] sm:$0xff]
    %v1175 = vld [vmem:[#allocation20 + $0x180] sm:$0xff]
    %v1176 = vld [vmem:[#allocation20 + $0x188] sm:$0xff]
    %v1177 = vld [vmem:[#allocation20 + $0x190] sm:$0xff]
    %v1178 = vld [vmem:[#allocation20 + $0x198] sm:$0xff]
    %v1179 = vld [vmem:[#allocation20 + $0x1a0] sm:$0xff]
    %v1180 = vld [vmem:[#allocation20 + $0x1a8] sm:$0xff]
    %v1181 = vld [vmem:[#allocation20 + $0x1b0] sm:$0xff]
    %v1182 = vld [vmem:[#allocation20 + $0x1b8] sm:$0xff]
    %v1183 = vld [vmem:[#allocation20 + $0x1c0] sm:$0xff]
    %v1184 = vld [vmem:[#allocation20 + $0x1c8] sm:$0xff]
    %v1185 = vld [vmem:[#allocation20 + $0x1d0] sm:$0xff]
    %v1186 = vld [vmem:[#allocation20 + $0x1d8] sm:$0xff]
    %v1187 = vld [vmem:[#allocation20 + $0x1e0] sm:$0xff]
    %v1188 = vld [vmem:[#allocation20 + $0x1e8] sm:$0xff]
    %v1189 = vld [vmem:[#allocation20 + $0x1f0] sm:$0xff]
    %v1190 = vld [vmem:[#allocation20 + $0x1f8] sm:$0xff]
    %v1191 = vld [vmem:[%s15] sm:$0x3]
    %v1192 = vld [vmem:[%s16] sm:$0x1]
    %v1193 = vld [vmem:[#allocation2] sm:$0xff]
    %v1194 = vld [vmem:[#allocation2 + $0x8] sm:$0xff]
    %v1195 = vld [vmem:[#allocation2 + $0x10] sm:$0xff]
    %v1196 = vld [vmem:[#allocation2 + $0x18] sm:$0xff]
    %v1198 = vperm.slane %v1191, 0
    %v1199 = vperm.slane %v1191, 1
    %1202 = vmatpush.msra.mxu0 %v1157
    %1203 = vmatpush.msra.mxu0 %v1155
    %1204 = vmatpush.msra.mxu0 %v1153
    %1205 = vmatpush.msra.mxu0 %v1151
    %1206 = vmatpush.msra.mxu0 %v1149
    %1207 = vmatpush.msra.mxu0 %v1147
    %1208 = vmatpush.msra.mxu0 %v1145
    %1209 = vmatpush.msra.mxu0 %v1143
    %1210 = vmatpush.msra.mxu0 %v1141
    %1211 = vmatpush.msra.mxu0 %v1139
    %1212 = vmatpush.msra.mxu0 %v1137
    %1213 = vmatpush.msra.mxu0 %v1135
    %1214 = vmatpush.msra.mxu0 %v1133
    %1215 = vmatpush.msra.mxu0 %v1131
    %1216 = vmatpush.msra.mxu0 %v1129
    %1217 = vmatpush.msra.mxu0 %v1127
    %1218 = vmatmul.f32.gmra.mxu0 %v1193
    %v1219 = vpop.f32.mrf.mxu0
    %v1220 = vadd.f32 %v1198, %v1219
    %1221 = vmatmul.f32.gmra.mxu0 %v1195
    %v1222 = vpop.f32.mrf.mxu0
    %v1223 = vadd.f32 %v1198, %v1222
    %1224 = vdwg.mxu0
    %1225 = vmatpush.msra.mxu0 %v1189
    %1226 = vmatpush.msra.mxu0 %v1187
    %1227 = vmatpush.msra.mxu0 %v1185
    %1228 = vmatpush.msra.mxu0 %v1183
    %1229 = vmatpush.msra.mxu0 %v1181
    %1230 = vmatpush.msra.mxu0 %v1179
    %1231 = vmatpush.msra.mxu0 %v1177
    %1232 = vmatpush.msra.mxu0 %v1175
    %1233 = vmatpush.msra.mxu0 %v1173
    %1234 = vmatpush.msra.mxu0 %v1171
    %1235 = vmatpush.msra.mxu0 %v1169
    %1236 = vmatpush.msra.mxu0 %v1167
    %1237 = vmatpush.msra.mxu0 %v1165
    %1238 = vmatpush.msra.mxu0 %v1163
    %1239 = vmatpush.msra.mxu0 %v1161
    %1240 = vmatpush.msra.mxu0 %v1159
    %1241 = vmatmul.f32.gmra.mxu0 %v1194
    %v1242 = vpop.f32.mrf.mxu0
    %v1243 = vadd.f32 %v1220, %v1242
    %1244 = vmatmul.f32.gmra.mxu0 %v1196
    %v1245 = vpop.f32.mrf.mxu0
    %v1246 = vadd.f32 %v1223, %v1245
    %1247 = vdwg.mxu0
    %1248 = vmatpush.msra.mxu0 %v1158
    %1249 = vmatpush.msra.mxu0 %v1156
    %1250 = vmatpush.msra.mxu0 %v1154
    %1251 = vmatpush.msra.mxu0 %v1152
    %1252 = vmatpush.msra.mxu0 %v1150
    %1253 = vmatpush.msra.mxu0 %v1148
    %1254 = vmatpush.msra.mxu0 %v1146
    %1255 = vmatpush.msra.mxu0 %v1144
    %1256 = vmatpush.msra.mxu0 %v1142
    %1257 = vmatpush.msra.mxu0 %v1140
    %1258 = vmatpush.msra.mxu0 %v1138
    %1259 = vmatpush.msra.mxu0 %v1136
    %1260 = vmatpush.msra.mxu0 %v1134
    %1261 = vmatpush.msra.mxu0 %v1132
    %1262 = vmatpush.msra.mxu0 %v1130
    %1263 = vmatpush.msra.mxu0 %v1128
    %1264 = vmatmul.f32.gmra.mxu0 %v1193
    %v1265 = vpop.f32.mrf.mxu0
    %v1266 = vadd.f32 %v1199, %v1265
    %1267 = vmatmul.f32.gmra.mxu0 %v1195
    %v1268 = vpop.f32.mrf.mxu0
    %v1269 = vadd.f32 %v1199, %v1268
    %1270 = vdwg.mxu0
    %1271 = vmatpush.msra.mxu0 %v1190
    %1272 = vmatpush.msra.mxu0 %v1188
    %1273 = vmatpush.msra.mxu0 %v1186
    %1274 = vmatpush.msra.mxu0 %v1184
    %1275 = vmatpush.msra.mxu0 %v1182
    %1276 = vmatpush.msra.mxu0 %v1180
    %1277 = vmatpush.msra.mxu0 %v1178
    %1278 = vmatpush.msra.mxu0 %v1176
    %1279 = vmatpush.msra.mxu0 %v1174
    %1280 = vmatpush.msra.mxu0 %v1172
    %1281 = vmatpush.msra.mxu0 %v1170
    %1282 = vmatpush.msra.mxu0 %v1168
    %1283 = vmatpush.msra.mxu0 %v1166
    %1284 = vmatpush.msra.mxu0 %v1164
    %1285 = vmatpush.msra.mxu0 %v1162
    %1286 = vmatpush.msra.mxu0 %v1160
    %1287 = vmatmul.f32.gmra.mxu0 %v1194
    %v1288 = vpop.f32.mrf.mxu0
    %v1289 = vadd.f32 %v1266, %v1288
    %1290 = vmatmul.f32.gmra.mxu0 %v1196
    %v1291 = vpop.f32.mrf.mxu0
    %v1292 = vadd.f32 %v1269, %v1291
    %1293 = vdwg.mxu0
    %v1294 = vmul.f32 %v1243, %v1243
    %v1295 = vmul.f32 %v1246, %v1246
    %v1296 = vmul.f32 %v1289, %v1289
    %v1297 = vmul.f32 %v1292, %v1292
    %v1298 = vadd.f32 %v1294, %v1296
    %v1299 = vadd.f32 %v1295, %v1297
    %v1300 = vadd.f32 %v1298, 1e-12
    %v1301 = vadd.f32 %v1299, 1e-12
    %v1302 = vrsqrt.pop %v1300
    %v1303 = vmul.f32 %v1302, %v1300
    %v1304 = vmul.f32 %v1303, %v1302
    %v1305 = vmul.f32 0.5, %v1304
    %v1306 = vsub.f32 1.5, %v1305
    %v1307 = vmul.f32 %v1302, %v1306
    %vm1308 = vweird.f32 %v1300
    %vm1309 = vweird.f32 %v1302
    %vm1310 = vmor %vm1308, %vm1309
    %v1311 = vsel %vm1310, %v1302, %v1307
    %v1312 = vrsqrt.pop %v1301
    %v1313 = vmul.f32 %v1312, %v1301
    %v1314 = vmul.f32 %v1313, %v1312
    %v1315 = vmul.f32 0.5, %v1314
    %v1316 = vsub.f32 1.5, %v1315
    %v1317 = vmul.f32 %v1312, %v1316
    %vm1318 = vweird.f32 %v1301
    %vm1319 = vweird.f32 %v1312
    %vm1320 = vmor %vm1318, %vm1319
    %v1321 = vsel %vm1320, %v1312, %v1317
    %v1322 = vmul.f32 %v1298, %v1311
    %v1323 = vmul.f32 %v1299, %v1321
    %v1325 = vperm.slane %v1192, 0
    %v1327 = vadd.f32 %v1322, %v1325
    %v1328 = vadd.f32 %v1323, %v1325
    %vm1329 = vcmp.gt.f32.partialorder %v1327, 0.0
    %vm1330 = vcmp.gt.f32.partialorder %v1328, 0.0
    %v1331 = vmul.f32 %v1325, %v1311
    %v1332 = vmul.f32 %v1325, %v1321
    %v1333 = vadd.f32 %v1331, 1.0
    %v1334 = vadd.f32 %v1332, 1.0
    %v1335 = vsel %vm1329, %v1333, 0.0
    %v1336 = vsel %vm1330, %v1334, 0.0
    %v1337 = vmul.f32 %v1243, %v1335
    %v1338 = vmul.f32 %v1246, %v1336
    %1339 = vst [vmem:[#allocation2] sm:$0xff] %v1337
    %1340 = vst [vmem:[#allocation2 + $0x10] sm:$0xff] %v1338
    %v1341 = vmul.f32 %v1289, %v1335
    %v1342 = vmul.f32 %v1292, %v1336
    %1343 = vst [vmem:[#allocation2 + $0x8] sm:$0xff] %v1341
    %1344 = vst [vmem:[#allocation2 + $0x18] sm:$0xff] %v1342
    %v1345 = vld [vmem:[#allocation21] sm:$0xff]
    %v1346 = vld [vmem:[#allocation21 + $0x8] sm:$0xff]
    %v1347 = vld [vmem:[#allocation21 + $0x10] sm:$0xff]
    %v1348 = vld [vmem:[#allocation21 + $0x18] sm:$0xff]
    %v1349 = vld [vmem:[#allocation21 + $0x20] sm:$0xff]
    %v1350 = vld [vmem:[#allocation21 + $0x28] sm:$0xff]
    %v1351 = vld [vmem:[#allocation21 + $0x30] sm:$0xff]
    %v1352 = vld [vmem:[#allocation21 + $0x38] sm:$0xff]
    %v1353 = vld [vmem:[#allocation21 + $0x40] sm:$0xff]
    %v1354 = vld [vmem:[#allocation21 + $0x48] sm:$0xff]
    %v1355 = vld [vmem:[#allocation21 + $0x50] sm:$0xff]
    %v1356 = vld [vmem:[#allocation21 + $0x58] sm:$0xff]
    %v1357 = vld [vmem:[#allocation21 + $0x60] sm:$0xff]
    %v1358 = vld [vmem:[#allocation21 + $0x68] sm:$0xff]
    %v1359 = vld [vmem:[#allocation21 + $0x70] sm:$0xff]
    %v1360 = vld [vmem:[#allocation21 + $0x78] sm:$0xff]
    %v1361 = vld [vmem:[#allocation21 + $0x80] sm:$0xff]
    %v1362 = vld [vmem:[#allocation21 + $0x88] sm:$0xff]
    %v1363 = vld [vmem:[#allocation21 + $0x90] sm:$0xff]
    %v1364 = vld [vmem:[#allocation21 + $0x98] sm:$0xff]
    %v1365 = vld [vmem:[#allocation21 + $0xa0] sm:$0xff]
    %v1366 = vld [vmem:[#allocation21 + $0xa8] sm:$0xff]
    %v1367 = vld [vmem:[#allocation21 + $0xb0] sm:$0xff]
    %v1368 = vld [vmem:[#allocation21 + $0xb8] sm:$0xff]
    %v1369 = vld [vmem:[#allocation21 + $0xc0] sm:$0xff]
    %v1370 = vld [vmem:[#allocation21 + $0xc8] sm:$0xff]
    %v1371 = vld [vmem:[#allocation21 + $0xd0] sm:$0xff]
    %v1372 = vld [vmem:[#allocation21 + $0xd8] sm:$0xff]
    %v1373 = vld [vmem:[#allocation21 + $0xe0] sm:$0xff]
    %v1374 = vld [vmem:[#allocation21 + $0xe8] sm:$0xff]
    %v1375 = vld [vmem:[#allocation21 + $0xf0] sm:$0xff]
    %v1376 = vld [vmem:[#allocation21 + $0xf8] sm:$0xff]
    %v1377 = vld [vmem:[#allocation21 + $0x100] sm:$0xff]
    %v1378 = vld [vmem:[#allocation21 + $0x108] sm:$0xff]
    %v1379 = vld [vmem:[#allocation21 + $0x110] sm:$0xff]
    %v1380 = vld [vmem:[#allocation21 + $0x118] sm:$0xff]
    %v1381 = vld [vmem:[#allocation21 + $0x120] sm:$0xff]
    %v1382 = vld [vmem:[#allocation21 + $0x128] sm:$0xff]
    %v1383 = vld [vmem:[#allocation21 + $0x130] sm:$0xff]
    %v1384 = vld [vmem:[#allocation21 + $0x138] sm:$0xff]
    %v1385 = vld [vmem:[#allocation21 + $0x140] sm:$0xff]
    %v1386 = vld [vmem:[#allocation21 + $0x148] sm:$0xff]
    %v1387 = vld [vmem:[#allocation21 + $0x150] sm:$0xff]
    %v1388 = vld [vmem:[#allocation21 + $0x158] sm:$0xff]
    %v1389 = vld [vmem:[#allocation21 + $0x160] sm:$0xff]
    %v1390 = vld [vmem:[#allocation21 + $0x168] sm:$0xff]
    %v1391 = vld [vmem:[#allocation21 + $0x170] sm:$0xff]
    %v1392 = vld [vmem:[#allocation21 + $0x178] sm:$0xff]
    %v1393 = vld [vmem:[#allocation21 + $0x180] sm:$0xff]
    %v1394 = vld [vmem:[#allocation21 + $0x188] sm:$0xff]
    %v1395 = vld [vmem:[#allocation21 + $0x190] sm:$0xff]
    %v1396 = vld [vmem:[#allocation21 + $0x198] sm:$0xff]
    %v1397 = vld [vmem:[#allocation21 + $0x1a0] sm:$0xff]
    %v1398 = vld [vmem:[#allocation21 + $0x1a8] sm:$0xff]
    %v1399 = vld [vmem:[#allocation21 + $0x1b0] sm:$0xff]
    %v1400 = vld [vmem:[#allocation21 + $0x1b8] sm:$0xff]
    %v1401 = vld [vmem:[#allocation21 + $0x1c0] sm:$0xff]
    %v1402 = vld [vmem:[#allocation21 + $0x1c8] sm:$0xff]
    %v1403 = vld [vmem:[#allocation21 + $0x1d0] sm:$0xff]
    %v1404 = vld [vmem:[#allocation21 + $0x1d8] sm:$0xff]
    %v1405 = vld [vmem:[#allocation21 + $0x1e0] sm:$0xff]
    %v1406 = vld [vmem:[#allocation21 + $0x1e8] sm:$0xff]
    %v1407 = vld [vmem:[#allocation21 + $0x1f0] sm:$0xff]
    %v1408 = vld [vmem:[#allocation21 + $0x1f8] sm:$0xff]
    %v1409 = vld [vmem:[%s18] sm:$0x3]
    %v1410 = vld [vmem:[#allocation2] sm:$0xff]
    %v1411 = vld [vmem:[#allocation2 + $0x8] sm:$0xff]
    %v1412 = vld [vmem:[#allocation2 + $0x10] sm:$0xff]
    %v1413 = vld [vmem:[#allocation2 + $0x18] sm:$0xff]
    %v1415 = vperm.slane %v1409, 0
    %v1416 = vperm.slane %v1409, 1
    %1419 = vmatpush.msra.mxu0 %v1375
    %1420 = vmatpush.msra.mxu0 %v1373
    %1421 = vmatpush.msra.mxu0 %v1371
    %1422 = vmatpush.msra.mxu0 %v1369
    %1423 = vmatpush.msra.mxu0 %v1367
    %1424 = vmatpush.msra.mxu0 %v1365
    %1425 = vmatpush.msra.mxu0 %v1363
    %1426 = vmatpush.msra.mxu0 %v1361
    %1427 = vmatpush.msra.mxu0 %v1359
    %1428 = vmatpush.msra.mxu0 %v1357
    %1429 = vmatpush.msra.mxu0 %v1355
    %1430 = vmatpush.msra.mxu0 %v1353
    %1431 = vmatpush.msra.mxu0 %v1351
    %1432 = vmatpush.msra.mxu0 %v1349
    %1433 = vmatpush.msra.mxu0 %v1347
    %1434 = vmatpush.msra.mxu0 %v1345
    %1435 = vmatmul.f32.gmra.mxu0 %v1410
    %v1436 = vpop.f32.mrf.mxu0
    %v1437 = vadd.f32 %v1415, %v1436
    %1438 = vmatmul.f32.gmra.mxu0 %v1412
    %v1439 = vpop.f32.mrf.mxu0
    %v1440 = vadd.f32 %v1415, %v1439
    %1441 = vdwg.mxu0
    %1442 = vmatpush.msra.mxu0 %v1407
    %1443 = vmatpush.msra.mxu0 %v1405
    %1444 = vmatpush.msra.mxu0 %v1403
    %1445 = vmatpush.msra.mxu0 %v1401
    %1446 = vmatpush.msra.mxu0 %v1399
    %1447 = vmatpush.msra.mxu0 %v1397
    %1448 = vmatpush.msra.mxu0 %v1395
    %1449 = vmatpush.msra.mxu0 %v1393
    %1450 = vmatpush.msra.mxu0 %v1391
    %1451 = vmatpush.msra.mxu0 %v1389
    %1452 = vmatpush.msra.mxu0 %v1387
    %1453 = vmatpush.msra.mxu0 %v1385
    %1454 = vmatpush.msra.mxu0 %v1383
    %1455 = vmatpush.msra.mxu0 %v1381
    %1456 = vmatpush.msra.mxu0 %v1379
    %1457 = vmatpush.msra.mxu0 %v1377
    %1458 = vmatmul.f32.gmra.mxu0 %v1411
    %v1459 = vpop.f32.mrf.mxu0
    %v1460 = vadd.f32 %v1437, %v1459
    %1461 = vmatmul.f32.gmra.mxu0 %v1413
    %v1462 = vpop.f32.mrf.mxu0
    %v1463 = vadd.f32 %v1440, %v1462
    %1464 = vdwg.mxu0
    %1465 = vmatpush.msra.mxu0 %v1376
    %1466 = vmatpush.msra.mxu0 %v1374
    %1467 = vmatpush.msra.mxu0 %v1372
    %1468 = vmatpush.msra.mxu0 %v1370
    %1469 = vmatpush.msra.mxu0 %v1368
    %1470 = vmatpush.msra.mxu0 %v1366
    %1471 = vmatpush.msra.mxu0 %v1364
    %1472 = vmatpush.msra.mxu0 %v1362
    %1473 = vmatpush.msra.mxu0 %v1360
    %1474 = vmatpush.msra.mxu0 %v1358
    %1475 = vmatpush.msra.mxu0 %v1356
    %1476 = vmatpush.msra.mxu0 %v1354
    %1477 = vmatpush.msra.mxu0 %v1352
    %1478 = vmatpush.msra.mxu0 %v1350
    %1479 = vmatpush.msra.mxu0 %v1348
    %1480 = vmatpush.msra.mxu0 %v1346
    %1481 = vmatmul.f32.gmra.mxu0 %v1410
    %v1482 = vpop.f32.mrf.mxu0
    %v1483 = vadd.f32 %v1416, %v1482
    %1484 = vmatmul.f32.gmra.mxu0 %v1412
    %v1485 = vpop.f32.mrf.mxu0
    %v1486 = vadd.f32 %v1416, %v1485
    %1487 = vdwg.mxu0
    %1488 = vmatpush.msra.mxu0 %v1408
    %1489 = vmatpush.msra.mxu0 %v1406
    %1490 = vmatpush.msra.mxu0 %v1404
    %1491 = vmatpush.msra.mxu0 %v1402
    %1492 = vmatpush.msra.mxu0 %v1400
    %1493 = vmatpush.msra.mxu0 %v1398
    %1494 = vmatpush.msra.mxu0 %v1396
    %1495 = vmatpush.msra.mxu0 %v1394
    %1496 = vmatpush.msra.mxu0 %v1392
    %1497 = vmatpush.msra.mxu0 %v1390
    %1498 = vmatpush.msra.mxu0 %v1388
    %1499 = vmatpush.msra.mxu0 %v1386
    %1500 = vmatpush.msra.mxu0 %v1384
    %1501 = vmatpush.msra.mxu0 %v1382
    %1502 = vmatpush.msra.mxu0 %v1380
    %1503 = vmatpush.msra.mxu0 %v1378
    %1504 = vmatmul.f32.gmra.mxu0 %v1411
    %v1505 = vpop.f32.mrf.mxu0
    %v1506 = vadd.f32 %v1483, %v1505
    %1507 = vmatmul.f32.gmra.mxu0 %v1413
    %v1508 = vpop.f32.mrf.mxu0
    %v1509 = vadd.f32 %v1486, %v1508
    %1510 = vdwg.mxu0
    %v1511 = vmul.f32 %v1460, %v1460
    %v1512 = vmul.f32 %v1463, %v1463
    %v1513 = vmul.f32 %v1506, %v1506
    %v1514 = vmul.f32 %v1509, %v1509
    %v1515 = vadd.f32 %v1511, %v1513
    %v1516 = vadd.f32 %v1512, %v1514
    %v1517 = vadd.f32 %v1515, 1e-12
    %v1518 = vadd.f32 %v1516, 1e-12
    %v1519 = vrsqrt.pop %v1517
    %v1520 = vmul.f32 %v1519, %v1517
    %v1521 = vmul.f32 %v1520, %v1519
    %v1522 = vmul.f32 0.5, %v1521
    %v1523 = vsub.f32 1.5, %v1522
    %v1524 = vmul.f32 %v1519, %v1523
    %vm1525 = vweird.f32 %v1517
    %vm1526 = vweird.f32 %v1519
    %vm1527 = vmor %vm1525, %vm1526
    %v1528 = vsel %vm1527, %v1519, %v1524
    %v1529 = vrsqrt.pop %v1518
    %v1530 = vmul.f32 %v1529, %v1518
    %v1531 = vmul.f32 %v1530, %v1529
    %v1532 = vmul.f32 0.5, %v1531
    %v1533 = vsub.f32 1.5, %v1532
    %v1534 = vmul.f32 %v1529, %v1533
    %vm1535 = vweird.f32 %v1518
    %vm1536 = vweird.f32 %v1529
    %vm1537 = vmor %vm1535, %vm1536
    %v1538 = vsel %vm1537, %v1529, %v1534
    %v1539 = vmul.f32 %v1515, %v1528
    %v1540 = vmul.f32 %v1516, %v1538
    %v1541 = vxor.u32 %v1539, 2147483648
    %v1542 = vxor.u32 %v1540, 2147483648
    %v1543 = vmul.f32 %v1541, 1.442695
    %v1544 = vpow.pop %v1543
    %v1545 = vmul.f32 %v1542, 1.442695
    %v1546 = vpow.pop %v1545
    %v1547 = vadd.f32 %v1544, 1.0
    %v1548 = vadd.f32 %v1546, 1.0
    %v1549 = vrcp.pop %v1547
    %v1550 = vmul.f32 %v1547, %v1549
    %v1551 = vsub.f32 1.0, %v1550
    %v1552 = vmul.f32 %v1549, %v1551
    %v1553 = vadd.f32 %v1549, %v1552
    %vm1554 = vweird.f32 %v1547
    %vm1555 = vweird.f32 %v1549
    %vm1556 = vmor %vm1554, %vm1555
    %v1557 = vsel %vm1556, %v1549, %v1553
    %v1558 = vand.u32 2147483647, %v1547
    %vm1559 = vcmp.eq.f32.partialorder %v1558, 8.507059e+37
    %v1560 = vand.u32 %v1547, 2147483648
    %v1561 = vor.u32 1.1754944e-38, %v1560
    %v1562 = vsel %vm1559, %v1561, %v1557
    %v1563 = vmul.f32 1.0, %v1562
    %v1564 = vrcp.pop %v1548
    %v1565 = vmul.f32 %v1548, %v1564
    %v1566 = vsub.f32 1.0, %v1565
    %v1567 = vmul.f32 %v1564, %v1566
    %v1568 = vadd.f32 %v1564, %v1567
    %vm1569 = vweird.f32 %v1548
    %vm1570 = vweird.f32 %v1564
    %vm1571 = vmor %vm1569, %vm1570
    %v1572 = vsel %vm1571, %v1564, %v1568
    %v1573 = vand.u32 2147483647, %v1548
    %vm1574 = vcmp.eq.f32.partialorder %v1573, 8.507059e+37
    %v1575 = vand.u32 %v1548, 2147483648
    %v1576 = vor.u32 1.1754944e-38, %v1575
    %v1577 = vsel %vm1574, %v1576, %v1572
    %v1578 = vmul.f32 1.0, %v1577
    %v1579 = vmul.f32 %v1563, %v1528
    %v1580 = vmul.f32 %v1578, %v1538
    %v1581 = vmul.f32 %v1460, %v1579
    %v1582 = vmul.f32 %v1463, %v1580
    %1583 = vst [vmem:[#allocation23] sm:$0xff] %v1581
    %1584 = vst [vmem:[#allocation23 + $0x10] sm:$0xff] %v1582
    %v1585 = vmul.f32 %v1506, %v1579
    %v1586 = vmul.f32 %v1509, %v1580
    %1587 = vst [vmem:[#allocation23 + $0x8] sm:$0xff] %v1585
    %1588 = vst [vmem:[#allocation23 + $0x18] sm:$0xff] %v1586
    // Predicated region
    $region126: #{tpu_custom_call.1} parent=1 // pred_check
      _
    $region127: #{tpu_custom_call.1} parent=1 // pred_check_branch
      %1590 = sbr.rel (0) target = $region129
    $region128: #{tpu_custom_call.1} parent=1 // pred_region
      %1592 = vsyncadd [#allocation5], 0
      %s1593 = sshll.u32 [#allocation23], 4
      %s1594 = int_to_ptr.vmem [resolvable:$true] %s1593
      %s1595 = sshll.u32 %s19, 4
      %s1596 = int_to_ptr.hbm [resolvable:$true] %s1595
      %1601 = dma.vmem_to_hbm [thread:$0]  %s1594, 512, %s1596, [#allocation5], 256, 256, 16
    $region129: #{tpu_custom_call.1} parent=1 // pred_fallthru
      _
    // Predicated region
    $region130: #{tpu_custom_call.1} parent=1 // pred_check
      _
    $region131: #{tpu_custom_call.1} parent=1 // pred_check_branch
      %1603 = sbr.rel (0) target = $region133
    $region132: #{tpu_custom_call.1} parent=1 // pred_region
      %1605 = dma.done [#allocation5], 512
    $region133: #{tpu_custom_call.1} parent=1 // pred_fallthru
      _
    %1606 = vsyncpa [#allocation4], 1
    %1607 = vsyncpa [#allocation7], 1
    %1608 = vsyncpa [#allocation10], 1
    %1609 = vsyncpa [#allocation13], 1
    %1610 = vsyncpa [#allocation16], 1
    %1611 = vsyncpa [#allocation19], 1
    %1612 = vsyncpa [#allocation22], 1
    %1613 = vsyncpa [#allocation5], 1

</llo_original>
